<compile_context>
chip_gen: v7x
topology: tpu7x:2x2x1
jax: 0.10.0
libtpu: 0.0.40
codegen_flags: <defaults>
</compile_context>

<pallas_src>
import math
import functools

import jax
import jax.numpy as jnp
from jax.experimental import pallas as pl
from jax.experimental.pallas import tpu as pltpu


# ----------------------------- helpers -----------------------------

def _tile(n, target):
    """Largest tile <= target that divides n (multiple of 16 if n > target)."""
    if n <= target:
        return n
    t = target - (target % 16)
    while t >= 16:
        if n % t == 0:
            return t
        t -= 16
    return n


def _ln(x_f32, g, b):
    """Torch-style LayerNorm: unbiased std, eps added to std.
    Per-row reciprocal (cheap, EUP-friendly) + multiply instead of a full-tile divide."""
    d = x_f32.shape[-1]
    mean = jnp.mean(x_f32, axis=-1, keepdims=True)
    c = x_f32 - mean
    var = jnp.sum(c * c, axis=-1, keepdims=True) / (d - 1)
    inv = pl.reciprocal(jnp.sqrt(var) + 1e-6)          # (tm, 1), exact
    return g * c * inv + b


# ----------------------------- Pallas kernels -----------------------------

def _ln_qkv_kernel(x_ref, g_ref, b_ref, w_ref, wb_ref, q_ref, k_ref, v_ref):
    # Fused: LayerNorm(x) -> single (D, 3D) projection -> split into q/k/v.
    # 1/sqrt(dk) is pre-folded into the Q columns of w_ref / wb_ref.
    x = x_ref[...].astype(jnp.float32)
    d = x.shape[-1]
    y = _ln(x, g_ref[...], b_ref[...])
    qkv = jnp.dot(y.astype(jnp.bfloat16), w_ref[...],
                  preferred_element_type=jnp.float32) + wb_ref[...]
    q_ref[...] = qkv[:, :d].astype(q_ref.dtype)
    k_ref[...] = qkv[:, d:2 * d].astype(k_ref.dtype)
    v_ref[...] = qkv[:, 2 * d:].astype(v_ref.dtype)


def _attn_proj_kernel(q_ref, k_ref, v_ref, m_ref, wo_ref, bo_ref, r_ref, o_ref,
                      *, heads):
    # Fused multi-head attention + Wo projection + residual add.
    # Blocks: q / resid / out (1, TQ, D); k/v (1, S, D); mask (1, 1, TQ, S) int8;
    #         wo (D, D) bf16; bo (1, D) f32.
    # Heads are static lane slices of D; per-head outputs are concatenated
    # in-register and stored via ONE lane-dense (TQ, D) write fused with Wo+residual.
    # TODO(synk): for large H use a head grid axis / fori_loop to bound live ranges;
    #             for long S add flash-style KV tiling + online softmax (v7x 64 MiB VMEM).
    q_all = q_ref[0]                       # (TQ, D) bf16
    k_all = k_ref[0]                       # (S,  D) bf16
    v_all = v_ref[0]                       # (S,  D) bf16
    keep = m_ref[0, 0] != 0                # (TQ, S) bool (from int8 mask)
    dk = q_all.shape[-1] // heads
    outs = []
    for h in range(heads):
        lo = h * dk
        q = q_all[:, lo:lo + dk]
        k = k_all[:, lo:lo + dk]
        v = v_all[:, lo:lo + dk]
        s = jnp.einsum("qd,kd->qk", q, k,
                       preferred_element_type=jnp.float32)   # scale folded into Wq
        s = jnp.where(keep, s, -1e9)       # masked_fill(mask == 0, -1e9)
        s = s - jnp.max(s, axis=-1, keepdims=True)
        p = jnp.exp(s)
        inv = pl.reciprocal(jnp.sum(p, axis=-1, keepdims=True))   # exact, (TQ, 1)
        o = jnp.dot(p.astype(v.dtype), v,
                    preferred_element_type=jnp.float32) * inv     # (TQ, dk) f32
        outs.append(o.astype(jnp.bfloat16))
    attn = jnp.concatenate(outs, axis=-1)                          # (TQ, D) bf16
    o_ref[0] = (r_ref[0]
                + jnp.dot(attn, wo_ref[...], preferred_element_type=jnp.float32)
                + bo_ref[...])


def _ln_ffn_residual_kernel(x_ref, g_ref, b_ref, w1_ref, b1_ref, w2_ref, b2_ref, o_ref):
    # Fused: x + W2 @ relu(W1 @ LayerNorm(x))
    # TODO(synk): for v7x (64 MiB VMEM) at large D/D_FF, tile the D_FF axis with an
    #             accumulator and/or single-buffer the constant-index weight specs;
    #             weights are held resident whole here (fits v5e/v6e 128 MiB).
    x = x_ref[...].astype(jnp.float32)
    y = _ln(x, g_ref[...], b_ref[...])
    h = jnp.dot(y.astype(jnp.bfloat16), w1_ref[...],
                preferred_element_type=jnp.float32) + b1_ref[...]
    h = jnp.maximum(h, 0.0)
    o_ref[...] = (
        x
        + jnp.dot(h.astype(jnp.bfloat16), w2_ref[...],
                  preferred_element_type=jnp.float32)
        + b2_ref[...]
    )


def _ln_kernel(x_ref, g_ref, b_ref, o_ref):
    o_ref[...] = _ln(x_ref[...].astype(jnp.float32), g_ref[...], b_ref[...])


# ----------------------------- wrappers -----------------------------

_VMEM_LIMIT = 64 * 1024 * 1024   # explicit scoped-VMEM budget (v5e default is 16 MiB)
_PAR1 = pltpu.CompilerParams(dimension_semantics=("parallel",),
                             vmem_limit_bytes=_VMEM_LIMIT)
_PAR2 = pltpu.CompilerParams(dimension_semantics=("parallel", "parallel"),
                             vmem_limit_bytes=_VMEM_LIMIT)


def ln_qkv(x2, g, b, wqkv, bqkv):
    R, D = x2.shape
    tm = _tile(R, 512)                    # big row tiles fill the 256x256 MXU (v6e/v7x)
    row = lambda i: (i, 0)
    rep = lambda i: (0, 0)
    return pl.pallas_call(
        _ln_qkv_kernel,
        out_shape=[jax.ShapeDtypeStruct((R, D), jnp.bfloat16)] * 3,
        grid=(R // tm,),
        in_specs=[pl.BlockSpec((tm, D), row),
                  pl.BlockSpec((1, D), rep),
                  pl.BlockSpec((1, D), rep),
                  pl.BlockSpec((D, 3 * D), rep),
                  pl.BlockSpec((1, 3 * D), rep)],
        out_specs=[pl.BlockSpec((tm, D), row)] * 3,
        compiler_params=_PAR1,
    )(x2, g, b, wqkv, bqkv)


def attention_proj_residual(q3, k3, v3, mask, wo_t, bo, resid3, heads):
    """Fused MHA + Wo projection + residual; returns updated residual stream (B,S,D) f32."""
    B, S, D = q3.shape
    tq = _tile(S, 256)
    kern = functools.partial(_attn_proj_kernel, heads=heads)
    row3 = lambda b, qi: (b, qi, 0)
    kv3 = lambda b, qi: (b, 0, 0)
    rep2 = lambda b, qi: (0, 0)
    return pl.pallas_call(
        kern,
        out_shape=jax.ShapeDtypeStruct((B, S, D), jnp.float32),
        grid=(B, S // tq),
        in_specs=[pl.BlockSpec((1, tq, D), row3),
                  pl.BlockSpec((1, S, D), kv3),
                  pl.BlockSpec((1, S, D), kv3),
                  pl.BlockSpec((1, 1, tq, S), lambda b, qi: (b, 0, qi, 0)),
                  pl.BlockSpec((D, D), rep2),
                  pl.BlockSpec((1, D), rep2),
                  pl.BlockSpec((1, tq, D), row3)],
        out_specs=pl.BlockSpec((1, tq, D), row3),
        input_output_aliases={6: 0},          # residual buffer reused as output
        compiler_params=_PAR2,
    )(q3, k3, v3, mask, wo_t, bo, resid3)


def ln_ffn_residual(x2, g, b, w1_t, b1, w2_t, b2):
    R, D = x2.shape
    DF = w1_t.shape[1]
    tm = _tile(R, 512)
    row = lambda i: (i, 0)
    rep = lambda i: (0, 0)
    return pl.pallas_call(
        _ln_ffn_residual_kernel,
        out_shape=jax.ShapeDtypeStruct((R, D), jnp.float32),
        grid=(R // tm,),
        in_specs=[pl.BlockSpec((tm, D), row),
                  pl.BlockSpec((1, D), rep),
                  pl.BlockSpec((1, D), rep),
                  pl.BlockSpec((D, DF), rep),
                  pl.BlockSpec((1, DF), rep),
                  pl.BlockSpec((DF, D), rep),
                  pl.BlockSpec((1, D), rep)],
        out_specs=pl.BlockSpec((tm, D), row),
        input_output_aliases={0: 0},          # x is both LN input and residual
        compiler_params=_PAR1,
    )(x2, g, b, w1_t, b1, w2_t, b2)


def layernorm(x2, g, b):
    R, D = x2.shape
    tm = _tile(R, 512)
    row = lambda i: (i, 0)
    rep = lambda i: (0, 0)
    return pl.pallas_call(
        _ln_kernel,
        out_shape=jax.ShapeDtypeStruct((R, D), jnp.float32),
        grid=(R // tm,),
        in_specs=[pl.BlockSpec((tm, D), row),
                  pl.BlockSpec((1, D), rep),
                  pl.BlockSpec((1, D), rep)],
        out_specs=pl.BlockSpec((tm, D), row),
        compiler_params=_PAR1,
    )(x2, g, b)


# ----------------------------- parameters -----------------------------

def _linear_init(key, out_f, in_f):
    kw, kb = jax.random.split(key)
    bound = 1.0 / math.sqrt(in_f)
    w = jax.random.uniform(kw, (out_f, in_f), jnp.float32, -bound, bound)
    b = jax.random.uniform(kb, (out_f,), jnp.float32, -bound, bound)
    return w, b


def init_encoder_params(key, n_layers, d_model, n_heads, d_ff):
    dk = d_model // n_heads
    scale = 1.0 / math.sqrt(dk)
    layers = []
    for _ in range(n_layers):
        key, *ks = jax.random.split(key, 7)
        wq, bq = _linear_init(ks[0], d_model, d_model)
        wk, bk = _linear_init(ks[1], d_model, d_model)
        wv, bv = _linear_init(ks[2], d_model, d_model)
        wo, bo = _linear_init(ks[3], d_model, d_model)
        w1, b1 = _linear_init(ks[4], d_ff, d_model)
        w2, b2 = _linear_init(ks[5], d_model, d_ff)
        # fold 1/sqrt(dk) softmax scale into the Q projection (weights + bias)
        wq = wq * scale
        bq = bq * scale
        layers.append(dict(
            # fused QKV weight, pre-transposed to (in, out), bf16 for the MXU
            wqkv=jnp.concatenate([wq, wk, wv], axis=0).T.astype(jnp.bfloat16),
            bqkv=jnp.concatenate([bq, bk, bv]).reshape(1, -1),
            wo_t=wo.T.astype(jnp.bfloat16), bo=bo.reshape(1, -1),
            w1_t=w1.T.astype(jnp.bfloat16), b1=b1.reshape(1, -1),
            w2_t=w2.T.astype(jnp.bfloat16), b2=b2.reshape(1, -1),
            ln1_g=jnp.ones((1, d_model), jnp.float32),
            ln1_b=jnp.zeros((1, d_model), jnp.float32),
            ln2_g=jnp.ones((1, d_model), jnp.float32),
            ln2_b=jnp.zeros((1, d_model), jnp.float32),
        ))
    return dict(
        layers=layers,
        norm_g=jnp.ones((1, d_model), jnp.float32),
        norm_b=jnp.zeros((1, d_model), jnp.float32),
    )


# ----------------------------- encoder forward -----------------------------

@functools.partial(jax.jit, static_argnames=("heads",))
def encoder_forward(params, x, mask, *, heads):
    """x: (B, S, D) float32; mask: (B, 1, S, S) (nonzero = keep) or None."""
    B, S, D = x.shape
    if mask is None:
        mask = jnp.ones((B, 1, S, S), jnp.int8)
    # int8 mask: 4x less mask DMA per q-tile than int32, same semantics.
    # TODO(synk): accept a (B, 1, 1, S) key-padding mask and broadcast in-kernel.
    mask = (mask != 0).astype(jnp.int8)

    x3 = x.astype(jnp.float32)                         # residual stream (B, S, D)
    for lp in params["layers"]:
        # sublayer 0: pre-norm multi-head self-attention + Wo + residual (fused)
        q2, k2, v2 = ln_qkv(x3.reshape(B * S, D),
                            lp["ln1_g"], lp["ln1_b"], lp["wqkv"], lp["bqkv"])
        x3 = attention_proj_residual(q2.reshape(B, S, D), k2.reshape(B, S, D),
                                     v2.reshape(B, S, D), mask,
                                     lp["wo_t"], lp["bo"], x3, heads)

        # sublayer 1: pre-norm position-wise FFN + residual (fused)
        x3 = ln_ffn_residual(x3.reshape(B * S, D), lp["ln2_g"], lp["ln2_b"],
                             lp["w1_t"], lp["b1"], lp["w2_t"], lp["b2"]
                             ).reshape(B, S, D)

    out = layernorm(x3.reshape(B * S, D), params["norm_g"], params["norm_b"])
    return out.reshape(B, S, D)


# ----------------------------- main -----------------------------

if __name__ == "__main__":
    B, S, D, H, D_FF, N = 2, 8, 32, 4, 64, 2
    key = jax.random.PRNGKey(0)
    kp, kx = jax.random.split(key)
    params = init_encoder_params(kp, N, D, H, D_FF)
    x = jax.random.normal(kx, (B, S, D), jnp.float32)
    mask = jnp.ones((B, 1, S, S), jnp.int32)  # no masking

    out = encoder_forward(params, x, mask, heads=H)
    jax.block_until_ready(out)
    assert out.shape == (B, S, D)
    assert bool(jnp.isfinite(out).all())
    print("KERNEL_OK")
</pallas_src>

<mosaic_0001>
module attributes {stable_mosaic.version = 11 : i64} {
  func.func @_ln_ffn_residual_kernel(%arg0: i32, %arg1: memref<16x32xf32, #tpu.memory_space<vmem>>, %arg2: memref<1x32xf32, #tpu.memory_space<vmem>>, %arg3: memref<1x32xf32, #tpu.memory_space<vmem>>, %arg4: memref<32x64xbf16, #tpu.memory_space<vmem>>, %arg5: memref<1x64xf32, #tpu.memory_space<vmem>>, %arg6: memref<64x32xbf16, #tpu.memory_space<vmem>>, %arg7: memref<1x32xf32, #tpu.memory_space<vmem>>, %arg8: memref<16x32xf32, #tpu.memory_space<vmem>>) attributes {dimension_semantics = [#tpu.dimension_semantics<parallel>], iteration_bounds = array<i64: 1>, scalar_prefetch = 0 : i64, scratch_operands = 0 : i64, tpu.core_type = #tpu.core_type<tc>, window_params = [{transform_indices = @transform_0, window_bounds = array<i64: 16, 32>}, {pipeline_mode = #tpu.pipeline_mode<synchronous>, transform_indices = @transform_1, window_bounds = array<i64: 1, 32>}, {pipeline_mode = #tpu.pipeline_mode<synchronous>, transform_indices = @transform_2, window_bounds = array<i64: 1, 32>}, {pipeline_mode = #tpu.pipeline_mode<synchronous>, transform_indices = @transform_3, window_bounds = array<i64: 32, 64>}, {pipeline_mode = #tpu.pipeline_mode<synchronous>, transform_indices = @transform_4, window_bounds = array<i64: 1, 64>}, {pipeline_mode = #tpu.pipeline_mode<synchronous>, transform_indices = @transform_5, window_bounds = array<i64: 64, 32>}, {pipeline_mode = #tpu.pipeline_mode<synchronous>, transform_indices = @transform_6, window_bounds = array<i64: 1, 32>}, {transform_indices = @transform_7, window_bounds = array<i64: 16, 32>}]} {
    %c0 = arith.constant 0 : index
    %c0_0 = arith.constant 0 : index
    %0 = vector.load %arg1[%c0, %c0_0] : memref<16x32xf32, #tpu.memory_space<vmem>>, vector<16x32xf32>
    %c0_1 = arith.constant 0 : index
    %c0_2 = arith.constant 0 : index
    %1 = vector.load %arg2[%c0_1, %c0_2] : memref<1x32xf32, #tpu.memory_space<vmem>>, vector<1x32xf32>
    %c0_3 = arith.constant 0 : index
    %c0_4 = arith.constant 0 : index
    %2 = vector.load %arg3[%c0_3, %c0_4] : memref<1x32xf32, #tpu.memory_space<vmem>>, vector<1x32xf32>
    %cst = arith.constant dense<0.000000e+00> : vector<16xf32>
    %3 = vector.multi_reduction <add>, %0, %cst [1] : vector<16x32xf32> to vector<16xf32>
    %4 = vector.shape_cast %3 : vector<16xf32> to vector<16x1xf32>
    %cst_5 = arith.constant 3.200000e+01 : f32
    %5 = vector.broadcast %cst_5 : f32 to vector<16x1xf32>
    %6 = arith.divf %4, %5 : vector<16x1xf32>
    %7 = vector.broadcast %6 : vector<16x1xf32> to vector<16x32xf32>
    %8 = arith.subf %0, %7 : vector<16x32xf32>
    %9 = arith.mulf %8, %8 : vector<16x32xf32>
    %cst_6 = arith.constant dense<0.000000e+00> : vector<16xf32>
    %10 = vector.multi_reduction <add>, %9, %cst_6 [1] : vector<16x32xf32> to vector<16xf32>
    %11 = vector.shape_cast %10 : vector<16xf32> to vector<16x1xf32>
    %cst_7 = arith.constant 3.100000e+01 : f32
    %12 = vector.broadcast %cst_7 : f32 to vector<16x1xf32>
    %13 = arith.divf %11, %12 : vector<16x1xf32>
    %14 = math.sqrt %13 : vector<16x1xf32>
    %cst_8 = arith.constant 9.99999997E-7 : f32
    %15 = vector.broadcast %cst_8 : f32 to vector<16x1xf32>
    %16 = arith.addf %14, %15 : vector<16x1xf32>
    %17 = tpu.reciprocal %16 : vector<16x1xf32> -> vector<16x1xf32>
    %18 = vector.broadcast %1 : vector<1x32xf32> to vector<16x32xf32>
    %19 = arith.mulf %18, %8 : vector<16x32xf32>
    %20 = vector.broadcast %17 : vector<16x1xf32> to vector<16x32xf32>
    %21 = arith.mulf %19, %20 : vector<16x32xf32>
    %22 = vector.broadcast %2 : vector<1x32xf32> to vector<16x32xf32>
    %23 = arith.addf %21, %22 : vector<16x32xf32>
    %24 = arith.truncf %23 : vector<16x32xf32> to vector<16x32xbf16>
    %c0_9 = arith.constant 0 : index
    %c0_10 = arith.constant 0 : index
    %25 = vector.load %arg4[%c0_9, %c0_10] : memref<32x64xbf16, #tpu.memory_space<vmem>>, vector<32x64xbf16>
    %cst_11 = arith.constant dense<0.000000e+00> : vector<16x64xf32>
    %26 = tpu.matmul %24, %25, %cst_11 {dimension_numbers = #tpu.dot_dimension_numbers<[1], [0], [0], [1], [0, 0, 1, 1], [], []>} : vector<16x32xbf16>, vector<32x64xbf16>, vector<16x64xf32> -> vector<16x64xf32>
    %c0_12 = arith.constant 0 : index
    %c0_13 = arith.constant 0 : index
    %27 = vector.load %arg5[%c0_12, %c0_13] : memref<1x64xf32, #tpu.memory_space<vmem>>, vector<1x64xf32>
    %28 = vector.broadcast %27 : vector<1x64xf32> to vector<16x64xf32>
    %29 = arith.addf %26, %28 : vector<16x64xf32>
    %cst_14 = arith.constant 0.000000e+00 : f32
    %30 = vector.broadcast %cst_14 : f32 to vector<16x64xf32>
    %31 = arith.maximumf %29, %30 : vector<16x64xf32>
    %32 = arith.truncf %31 : vector<16x64xf32> to vector<16x64xbf16>
    %c0_15 = arith.constant 0 : index
    %c0_16 = arith.constant 0 : index
    %33 = vector.load %arg6[%c0_15, %c0_16] : memref<64x32xbf16, #tpu.memory_space<vmem>>, vector<64x32xbf16>
    %cst_17 = arith.constant dense<0.000000e+00> : vector<16x32xf32>
    %34 = tpu.matmul %32, %33, %cst_17 {dimension_numbers = #tpu.dot_dimension_numbers<[1], [0], [0], [1], [0, 0, 1, 1], [], []>} : vector<16x64xbf16>, vector<64x32xbf16>, vector<16x32xf32> -> vector<16x32xf32>
    %35 = arith.addf %0, %34 : vector<16x32xf32>
    %c0_18 = arith.constant 0 : index
    %c0_19 = arith.constant 0 : index
    %36 = vector.load %arg7[%c0_18, %c0_19] : memref<1x32xf32, #tpu.memory_space<vmem>>, vector<1x32xf32>
    %37 = vector.broadcast %36 : vector<1x32xf32> to vector<16x32xf32>
    %38 = arith.addf %35, %37 : vector<16x32xf32>
    %c0_20 = arith.constant 0 : index
    %c0_21 = arith.constant 0 : index
    %39 = vector.load %arg8[%c0_20, %c0_21] : memref<16x32xf32, #tpu.memory_space<vmem>>, vector<16x32xf32>
    tpu.vector_store %arg8[%c0_20, %c0_21], %38 {strides = array<i32>} : memref<16x32xf32, #tpu.memory_space<vmem>>, vector<16x32xf32>,
    return
  }
  func.func @transform_0(%arg0: i32) -> (i32, i32) {
    %c0_i32 = arith.constant 0 : i32
    %c0_i32_0 = arith.constant 0 : i32
    return %arg0, %c0_i32 : i32, i32
  }
  func.func @transform_1(%arg0: i32) -> (i32, i32) {
    %c0_i32 = arith.constant 0 : i32
    %c0_i32_0 = arith.constant 0 : i32
    %c0_i32_1 = arith.constant 0 : i32
    return %c0_i32, %c0_i32_0 : i32, i32
  }
  func.func @transform_2(%arg0: i32) -> (i32, i32) {
    %c0_i32 = arith.constant 0 : i32
    %c0_i32_0 = arith.constant 0 : i32
    %c0_i32_1 = arith.constant 0 : i32
    return %c0_i32, %c0_i32_0 : i32, i32
  }
  func.func @transform_3(%arg0: i32) -> (i32, i32) {
    %c0_i32 = arith.constant 0 : i32
    %c0_i32_0 = arith.constant 0 : i32
    %c0_i32_1 = arith.constant 0 : i32
    return %c0_i32, %c0_i32_0 : i32, i32
  }
  func.func @transform_4(%arg0: i32) -> (i32, i32) {
    %c0_i32 = arith.constant 0 : i32
    %c0_i32_0 = arith.constant 0 : i32
    %c0_i32_1 = arith.constant 0 : i32
    return %c0_i32, %c0_i32_0 : i32, i32
  }
  func.func @transform_5(%arg0: i32) -> (i32, i32) {
    %c0_i32 = arith.constant 0 : i32
    %c0_i32_0 = arith.constant 0 : i32
    %c0_i32_1 = arith.constant 0 : i32
    return %c0_i32, %c0_i32_0 : i32, i32
  }
  func.func @transform_6(%arg0: i32) -> (i32, i32) {
    %c0_i32 = arith.constant 0 : i32
    %c0_i32_0 = arith.constant 0 : i32
    %c0_i32_1 = arith.constant 0 : i32
    return %c0_i32, %c0_i32_0 : i32, i32
  }
  func.func @transform_7(%arg0: i32) -> (i32, i32) {
    %c0_i32 = arith.constant 0 : i32
    %c0_i32_0 = arith.constant 0 : i32
    return %arg0, %c0_i32 : i32, i32
  }
}

module attributes {stable_mosaic.version = 11 : i64} {
  func.func @_attn_proj_kernel(%arg0: i32, %arg1: i32, %arg2: memref<1x8x32xbf16, #tpu.memory_space<vmem>>, %arg3: memref<1x8x32xbf16, #tpu.memory_space<vmem>>, %arg4: memref<1x8x32xbf16, #tpu.memory_space<vmem>>, %arg5: memref<1x1x8x8xi8, #tpu.memory_space<vmem>>, %arg6: memref<32x32xbf16, #tpu.memory_space<vmem>>, %arg7: memref<1x32xf32, #tpu.memory_space<vmem>>, %arg8: memref<1x8x32xf32, #tpu.memory_space<vmem>>, %arg9: memref<1x8x32xf32, #tpu.memory_space<vmem>>) attributes {dimension_semantics = [#tpu.dimension_semantics<parallel>, #tpu.dimension_semantics<parallel>], iteration_bounds = array<i64: 2, 1>, scalar_prefetch = 0 : i64, scratch_operands = 0 : i64, tpu.core_type = #tpu.core_type<tc>, window_params = [{transform_indices = @transform_0, window_bounds = array<i64: 1, 8, 32>}, {transform_indices = @transform_1, window_bounds = array<i64: 1, 8, 32>}, {transform_indices = @transform_2, window_bounds = array<i64: 1, 8, 32>}, {transform_indices = @transform_3, window_bounds = array<i64: 1, 1, 8, 8>}, {pipeline_mode = #tpu.pipeline_mode<synchronous>, transform_indices = @transform_4, window_bounds = array<i64: 32, 32>}, {pipeline_mode = #tpu.pipeline_mode<synchronous>, transform_indices = @transform_5, window_bounds = array<i64: 1, 32>}, {transform_indices = @transform_6, window_bounds = array<i64: 1, 8, 32>}, {transform_indices = @transform_7, window_bounds = array<i64: 1, 8, 32>}]} {
    %c0 = arith.constant 0 : index
    %c0_0 = arith.constant 0 : index
    %c0_1 = arith.constant 0 : index
    %0 = vector.load %arg2[%c0, %c0_0, %c0_1] : memref<1x8x32xbf16, #tpu.memory_space<vmem>>, vector<1x8x32xbf16>
    %1 = vector.shape_cast %0 : vector<1x8x32xbf16> to vector<8x32xbf16>
    %c0_2 = arith.constant 0 : index
    %c0_3 = arith.constant 0 : index
    %c0_4 = arith.constant 0 : index
    %2 = vector.load %arg3[%c0_2, %c0_3, %c0_4] : memref<1x8x32xbf16, #tpu.memory_space<vmem>>, vector<1x8x32xbf16>
    %3 = vector.shape_cast %2 : vector<1x8x32xbf16> to vector<8x32xbf16>
    %c0_5 = arith.constant 0 : index
    %c0_6 = arith.constant 0 : index
    %c0_7 = arith.constant 0 : index
    %4 = vector.load %arg4[%c0_5, %c0_6, %c0_7] : memref<1x8x32xbf16, #tpu.memory_space<vmem>>, vector<1x8x32xbf16>
    %5 = vector.shape_cast %4 : vector<1x8x32xbf16> to vector<8x32xbf16>
    %c0_8 = arith.constant 0 : index
    %c0_9 = arith.constant 0 : index
    %c0_10 = arith.constant 0 : index
    %c0_11 = arith.constant 0 : index
    %6 = vector.load %arg5[%c0_8, %c0_9, %c0_10, %c0_11] : memref<1x1x8x8xi8, #tpu.memory_space<vmem>>, vector<1x1x8x8xi8>
    %7 = vector.shape_cast %6 : vector<1x1x8x8xi8> to vector<8x8xi8>
    %c0_i8 = arith.constant 0 : i8
    %8 = vector.broadcast %c0_i8 : i8 to vector<8x8xi8>
    %9 = arith.cmpi ne, %7, %8 : vector<8x8xi8>
    %10 = vector.extract_strided_slice %1 {offsets = [0, 0], sizes = [8, 8], strides = [1, 1]} : vector<8x32xbf16> to vector<8x8xbf16>
    %11 = vector.extract_strided_slice %3 {offsets = [0, 0], sizes = [8, 8], strides = [1, 1]} : vector<8x32xbf16> to vector<8x8xbf16>
    %12 = vector.extract_strided_slice %5 {offsets = [0, 0], sizes = [8, 8], strides = [1, 1]} : vector<8x32xbf16> to vector<8x8xbf16>
    "tpu.trace_start"() <{level = 10 : i32, message = "qd,kd->qk"}> : () -> ()
    %cst = arith.constant dense<0.000000e+00> : vector<8x8xf32>
    %13 = tpu.matmul %10, %11, %cst {dimension_numbers = #tpu.dot_dimension_numbers<[1], [1], [0], [0], [0, 0, 1, 0], [], []>} : vector<8x8xbf16>, vector<8x8xbf16>, vector<8x8xf32> -> vector<8x8xf32>
    %cst_12 = arith.constant -1.000000e+09 : f32
    "tpu.trace_stop"() : () -> ()
    %14 = vector.broadcast %cst_12 : f32 to vector<8x8xf32>
    %15 = arith.select %9, %13, %14 : vector<8x8xi1>, vector<8x8xf32>
    %cst_13 = arith.constant dense<0xFF800000> : vector<8xf32>
    %16 = vector.multi_reduction <maximumf>, %15, %cst_13 [1] : vector<8x8xf32> to vector<8xf32>
    %17 = vector.shape_cast %16 : vector<8xf32> to vector<8x1xf32>
    %18 = vector.broadcast %17 : vector<8x1xf32> to vector<8x8xf32>
    %19 = arith.subf %15, %18 : vector<8x8xf32>
    %20 = math.exp %19 : vector<8x8xf32>
    %cst_14 = arith.constant dense<0.000000e+00> : vector<8xf32>
    %21 = vector.multi_reduction <add>, %20, %cst_14 [1] : vector<8x8xf32> to vector<8xf32>
    %22 = vector.shape_cast %21 : vector<8xf32> to vector<8x1xf32>
    %23 = tpu.reciprocal %22 : vector<8x1xf32> -> vector<8x1xf32>
    %24 = arith.truncf %20 : vector<8x8xf32> to vector<8x8xbf16>
    %cst_15 = arith.constant dense<0.000000e+00> : vector<8x8xf32>
    %25 = tpu.matmul %24, %12, %cst_15 {dimension_numbers = #tpu.dot_dimension_numbers<[1], [0], [0], [1], [0, 0, 1, 1], [], []>} : vector<8x8xbf16>, vector<8x8xbf16>, vector<8x8xf32> -> vector<8x8xf32>
    %26 = vector.broadcast %23 : vector<8x1xf32> to vector<8x8xf32>
    %27 = arith.mulf %25, %26 : vector<8x8xf32>
    %28 = arith.truncf %27 : vector<8x8xf32> to vector<8x8xbf16>
    %29 = vector.extract_strided_slice %1 {offsets = [0, 8], sizes = [8, 8], strides = [1, 1]} : vector<8x32xbf16> to vector<8x8xbf16>
    %30 = vector.extract_strided_slice %3 {offsets = [0, 8], sizes = [8, 8], strides = [1, 1]} : vector<8x32xbf16> to vector<8x8xbf16>
    %31 = vector.extract_strided_slice %5 {offsets = [0, 8], sizes = [8, 8], strides = [1, 1]} : vector<8x32xbf16> to vector<8x8xbf16>
    "tpu.trace_start"() <{level = 10 : i32, message = "qd,kd->qk"}> : () -> ()
    %cst_16 = arith.constant dense<0.000000e+00> : vector<8x8xf32>
    %32 = tpu.matmul %29, %30, %cst_16 {dimension_numbers = #tpu.dot_dimension_numbers<[1], [1], [0], [0], [0, 0, 1, 0], [], []>} : vector<8x8xbf16>, vector<8x8xbf16>, vector<8x8xf32> -> vector<8x8xf32>
    %cst_17 = arith.constant -1.000000e+09 : f32
    "tpu.trace_stop"() : () -> ()
    %33 = vector.broadcast %cst_17 : f32 to vector<8x8xf32>
    %34 = arith.select %9, %32, %33 : vector<8x8xi1>, vector<8x8xf32>
    %cst_18 = arith.constant dense<0xFF800000> : vector<8xf32>
    %35 = vector.multi_reduction <maximumf>, %34, %cst_18 [1] : vector<8x8xf32> to vector<8xf32>
    %36 = vector.shape_cast %35 : vector<8xf32> to vector<8x1xf32>
    %37 = vector.broadcast %36 : vector<8x1xf32> to vector<8x8xf32>
    %38 = arith.subf %34, %37 : vector<8x8xf32>
    %39 = math.exp %38 : vector<8x8xf32>
    %cst_19 = arith.constant dense<0.000000e+00> : vector<8xf32>
    %40 = vector.multi_reduction <add>, %39, %cst_19 [1] : vector<8x8xf32> to vector<8xf32>
    %41 = vector.shape_cast %40 : vector<8xf32> to vector<8x1xf32>
    %42 = tpu.reciprocal %41 : vector<8x1xf32> -> vector<8x1xf32>
    %43 = arith.truncf %39 : vector<8x8xf32> to vector<8x8xbf16>
    %cst_20 = arith.constant dense<0.000000e+00> : vector<8x8xf32>
    %44 = tpu.matmul %43, %31, %cst_20 {dimension_numbers = #tpu.dot_dimension_numbers<[1], [0], [0], [1], [0, 0, 1, 1], [], []>} : vector<8x8xbf16>, vector<8x8xbf16>, vector<8x8xf32> -> vector<8x8xf32>
    %45 = vector.broadcast %42 : vector<8x1xf32> to vector<8x8xf32>
    %46 = arith.mulf %44, %45 : vector<8x8xf32>
    %47 = arith.truncf %46 : vector<8x8xf32> to vector<8x8xbf16>
    %48 = vector.extract_strided_slice %1 {offsets = [0, 16], sizes = [8, 8], strides = [1, 1]} : vector<8x32xbf16> to vector<8x8xbf16>
    %49 = vector.extract_strided_slice %3 {offsets = [0, 16], sizes = [8, 8], strides = [1, 1]} : vector<8x32xbf16> to vector<8x8xbf16>
    %50 = vector.extract_strided_slice %5 {offsets = [0, 16], sizes = [8, 8], strides = [1, 1]} : vector<8x32xbf16> to vector<8x8xbf16>
    "tpu.trace_start"() <{level = 10 : i32, message = "qd,kd->qk"}> : () -> ()
    %cst_21 = arith.constant dense<0.000000e+00> : vector<8x8xf32>
    %51 = tpu.matmul %48, %49, %cst_21 {dimension_numbers = #tpu.dot_dimension_numbers<[1], [1], [0], [0], [0, 0, 1, 0], [], []>} : vector<8x8xbf16>, vector<8x8xbf16>, vector<8x8xf32> -> vector<8x8xf32>
    %cst_22 = arith.constant -1.000000e+09 : f32
    "tpu.trace_stop"() : () -> ()
    %52 = vector.broadcast %cst_22 : f32 to vector<8x8xf32>
    %53 = arith.select %9, %51, %52 : vector<8x8xi1>, vector<8x8xf32>
    %cst_23 = arith.constant dense<0xFF800000> : vector<8xf32>
    %54 = vector.multi_reduction <maximumf>, %53, %cst_23 [1] : vector<8x8xf32> to vector<8xf32>
    %55 = vector.shape_cast %54 : vector<8xf32> to vector<8x1xf32>
    %56 = vector.broadcast %55 : vector<8x1xf32> to vector<8x8xf32>
    %57 = arith.subf %53, %56 : vector<8x8xf32>
    %58 = math.exp %57 : vector<8x8xf32>
    %cst_24 = arith.constant dense<0.000000e+00> : vector<8xf32>
    %59 = vector.multi_reduction <add>, %58, %cst_24 [1] : vector<8x8xf32> to vector<8xf32>
    %60 = vector.shape_cast %59 : vector<8xf32> to vector<8x1xf32>
    %61 = tpu.reciprocal %60 : vector<8x1xf32> -> vector<8x1xf32>
    %62 = arith.truncf %58 : vector<8x8xf32> to vector<8x8xbf16>
    %cst_25 = arith.constant dense<0.000000e+00> : vector<8x8xf32>
    %63 = tpu.matmul %62, %50, %cst_25 {dimension_numbers = #tpu.dot_dimension_numbers<[1], [0], [0], [1], [0, 0, 1, 1], [], []>} : vector<8x8xbf16>, vector<8x8xbf16>, vector<8x8xf32> -> vector<8x8xf32>
    %64 = vector.broadcast %61 : vector<8x1xf32> to vector<8x8xf32>
    %65 = arith.mulf %63, %64 : vector<8x8xf32>
    %66 = arith.truncf %65 : vector<8x8xf32> to vector<8x8xbf16>
    %67 = vector.extract_strided_slice %1 {offsets = [0, 24], sizes = [8, 8], strides = [1, 1]} : vector<8x32xbf16> to vector<8x8xbf16>
    %68 = vector.extract_strided_slice %3 {offsets = [0, 24], sizes = [8, 8], strides = [1, 1]} : vector<8x32xbf16> to vector<8x8xbf16>
    %69 = vector.extract_strided_slice %5 {offsets = [0, 24], sizes = [8, 8], strides = [1, 1]} : vector<8x32xbf16> to vector<8x8xbf16>
    "tpu.trace_start"() <{level = 10 : i32, message = "qd,kd->qk"}> : () -> ()
    %cst_26 = arith.constant dense<0.000000e+00> : vector<8x8xf32>
    %70 = tpu.matmul %67, %68, %cst_26 {dimension_numbers = #tpu.dot_dimension_numbers<[1], [1], [0], [0], [0, 0, 1, 0], [], []>} : vector<8x8xbf16>, vector<8x8xbf16>, vector<8x8xf32> -> vector<8x8xf32>
    %cst_27 = arith.constant -1.000000e+09 : f32
    "tpu.trace_stop"() : () -> ()
    %71 = vector.broadcast %cst_27 : f32 to vector<8x8xf32>
    %72 = arith.select %9, %70, %71 : vector<8x8xi1>, vector<8x8xf32>
    %cst_28 = arith.constant dense<0xFF800000> : vector<8xf32>
    %73 = vector.multi_reduction <maximumf>, %72, %cst_28 [1] : vector<8x8xf32> to vector<8xf32>
    %74 = vector.shape_cast %73 : vector<8xf32> to vector<8x1xf32>
    %75 = vector.broadcast %74 : vector<8x1xf32> to vector<8x8xf32>
    %76 = arith.subf %72, %75 : vector<8x8xf32>
    %77 = math.exp %76 : vector<8x8xf32>
    %cst_29 = arith.constant dense<0.000000e+00> : vector<8xf32>
    %78 = vector.multi_reduction <add>, %77, %cst_29 [1] : vector<8x8xf32> to vector<8xf32>
    %79 = vector.shape_cast %78 : vector<8xf32> to vector<8x1xf32>
    %80 = tpu.reciprocal %79 : vector<8x1xf32> -> vector<8x1xf32>
    %81 = arith.truncf %77 : vector<8x8xf32> to vector<8x8xbf16>
    %cst_30 = arith.constant dense<0.000000e+00> : vector<8x8xf32>
    %82 = tpu.matmul %81, %69, %cst_30 {dimension_numbers = #tpu.dot_dimension_numbers<[1], [0], [0], [1], [0, 0, 1, 1], [], []>} : vector<8x8xbf16>, vector<8x8xbf16>, vector<8x8xf32> -> vector<8x8xf32>
    %83 = vector.broadcast %80 : vector<8x1xf32> to vector<8x8xf32>
    %84 = arith.mulf %82, %83 : vector<8x8xf32>
    %85 = arith.truncf %84 : vector<8x8xf32> to vector<8x8xbf16>
    %86 = tpu.concatenate %28, %47, %66, %85 in 1 : vector<8x8xbf16>, vector<8x8xbf16>, vector<8x8xbf16>, vector<8x8xbf16> -> vector<8x32xbf16>
    %c0_31 = arith.constant 0 : index
    %c0_32 = arith.constant 0 : index
    %c0_33 = arith.constant 0 : index
    %87 = vector.load %arg8[%c0_31, %c0_32, %c0_33] : memref<1x8x32xf32, #tpu.memory_space<vmem>>, vector<1x8x32xf32>
    %88 = vector.shape_cast %87 : vector<1x8x32xf32> to vector<8x32xf32>
    %c0_34 = arith.constant 0 : index
    %c0_35 = arith.constant 0 : index
    %89 = vector.load %arg6[%c0_34, %c0_35] : memref<32x32xbf16, #tpu.memory_space<vmem>>, vector<32x32xbf16>
    %cst_36 = arith.constant dense<0.000000e+00> : vector<8x32xf32>
    %90 = tpu.matmul %86, %89, %cst_36 {dimension_numbers = #tpu.dot_dimension_numbers<[1], [0], [0], [1], [0, 0, 1, 1], [], []>} : vector<8x32xbf16>, vector<32x32xbf16>, vector<8x32xf32> -> vector<8x32xf32>
    %91 = arith.addf %88, %90 : vector<8x32xf32>
    %c0_37 = arith.constant 0 : index
    %c0_38 = arith.constant 0 : index
    %92 = vector.load %arg7[%c0_37, %c0_38] : memref<1x32xf32, #tpu.memory_space<vmem>>, vector<1x32xf32>
    %93 = vector.broadcast %92 : vector<1x32xf32> to vector<8x32xf32>
    %94 = arith.addf %91, %93 : vector<8x32xf32>
    %c0_39 = arith.constant 0 : index
    %c0_40 = arith.constant 0 : index
    %c0_41 = arith.constant 0 : index
    %95 = vector.load %arg9[%c0_39, %c0_40, %c0_41] : memref<1x8x32xf32, #tpu.memory_space<vmem>>, vector<1x8x32xf32>
    %96 = vector.shape_cast %95 : vector<1x8x32xf32> to vector<8x32xf32>
    %97 = vector.shape_cast %94 : vector<8x32xf32> to vector<1x8x32xf32>
    tpu.vector_store %arg9[%c0_39, %c0_40, %c0_41], %97 {strides = array<i32>} : memref<1x8x32xf32, #tpu.memory_space<vmem>>, vector<1x8x32xf32>,
    return
  }
  func.func @transform_0(%arg0: i32, %arg1: i32) -> (i32, i32, i32) {
    %c0_i32 = arith.constant 0 : i32
    %c0_i32_0 = arith.constant 0 : i32
    return %arg0, %arg1, %c0_i32 : i32, i32, i32
  }
  func.func @transform_1(%arg0: i32, %arg1: i32) -> (i32, i32, i32) {
    %c0_i32 = arith.constant 0 : i32
    %c0_i32_0 = arith.constant 0 : i32
    %c0_i32_1 = arith.constant 0 : i32
    return %arg0, %c0_i32, %c0_i32_0 : i32, i32, i32
  }
  func.func @transform_2(%arg0: i32, %arg1: i32) -> (i32, i32, i32) {
    %c0_i32 = arith.constant 0 : i32
    %c0_i32_0 = arith.constant 0 : i32
    %c0_i32_1 = arith.constant 0 : i32
    return %arg0, %c0_i32, %c0_i32_0 : i32, i32, i32
  }
  func.func @transform_3(%arg0: i32, %arg1: i32) -> (i32, i32, i32, i32) {
    %c0_i32 = arith.constant 0 : i32
    %c0_i32_0 = arith.constant 0 : i32
    %c0_i32_1 = arith.constant 0 : i32
    return %arg0, %c0_i32, %arg1, %c0_i32_0 : i32, i32, i32, i32
  }
  func.func @transform_4(%arg0: i32, %arg1: i32) -> (i32, i32) {
    %c0_i32 = arith.constant 0 : i32
    %c0_i32_0 = arith.constant 0 : i32
    %c0_i32_1 = arith.constant 0 : i32
    return %c0_i32, %c0_i32_0 : i32, i32
  }
  func.func @transform_5(%arg0: i32, %arg1: i32) -> (i32, i32) {
    %c0_i32 = arith.constant 0 : i32
    %c0_i32_0 = arith.constant 0 : i32
    %c0_i32_1 = arith.constant 0 : i32
    return %c0_i32, %c0_i32_0 : i32, i32
  }
  func.func @transform_6(%arg0: i32, %arg1: i32) -> (i32, i32, i32) {
    %c0_i32 = arith.constant 0 : i32
    %c0_i32_0 = arith.constant 0 : i32
    return %arg0, %arg1, %c0_i32 : i32, i32, i32
  }
  func.func @transform_7(%arg0: i32, %arg1: i32) -> (i32, i32, i32) {
    %c0_i32 = arith.constant 0 : i32
    %c0_i32_0 = arith.constant 0 : i32
    return %arg0, %arg1, %c0_i32 : i32, i32, i32
  }
}

module attributes {stable_mosaic.version = 11 : i64} {
  func.func @_ln_qkv_kernel(%arg0: i32, %arg1: memref<16x32xf32, #tpu.memory_space<vmem>>, %arg2: memref<1x32xf32, #tpu.memory_space<vmem>>, %arg3: memref<1x32xf32, #tpu.memory_space<vmem>>, %arg4: memref<32x96xbf16, #tpu.memory_space<vmem>>, %arg5: memref<1x96xf32, #tpu.memory_space<vmem>>, %arg6: memref<16x32xbf16, #tpu.memory_space<vmem>>, %arg7: memref<16x32xbf16, #tpu.memory_space<vmem>>, %arg8: memref<16x32xbf16, #tpu.memory_space<vmem>>) attributes {dimension_semantics = [#tpu.dimension_semantics<parallel>], iteration_bounds = array<i64: 1>, scalar_prefetch = 0 : i64, scratch_operands = 0 : i64, tpu.core_type = #tpu.core_type<tc>, window_params = [{transform_indices = @transform_0, window_bounds = array<i64: 16, 32>}, {pipeline_mode = #tpu.pipeline_mode<synchronous>, transform_indices = @transform_1, window_bounds = array<i64: 1, 32>}, {pipeline_mode = #tpu.pipeline_mode<synchronous>, transform_indices = @transform_2, window_bounds = array<i64: 1, 32>}, {pipeline_mode = #tpu.pipeline_mode<synchronous>, transform_indices = @transform_3, window_bounds = array<i64: 32, 96>}, {pipeline_mode = #tpu.pipeline_mode<synchronous>, transform_indices = @transform_4, window_bounds = array<i64: 1, 96>}, {transform_indices = @transform_5, window_bounds = array<i64: 16, 32>}, {transform_indices = @transform_6, window_bounds = array<i64: 16, 32>}, {transform_indices = @transform_7, window_bounds = array<i64: 16, 32>}]} {
    %c0 = arith.constant 0 : index
    %c0_0 = arith.constant 0 : index
    %0 = vector.load %arg1[%c0, %c0_0] : memref<16x32xf32, #tpu.memory_space<vmem>>, vector<16x32xf32>
    %c0_1 = arith.constant 0 : index
    %c0_2 = arith.constant 0 : index
    %1 = vector.load %arg2[%c0_1, %c0_2] : memref<1x32xf32, #tpu.memory_space<vmem>>, vector<1x32xf32>
    %c0_3 = arith.constant 0 : index
    %c0_4 = arith.constant 0 : index
    %2 = vector.load %arg3[%c0_3, %c0_4] : memref<1x32xf32, #tpu.memory_space<vmem>>, vector<1x32xf32>
    %cst = arith.constant dense<0.000000e+00> : vector<16xf32>
    %3 = vector.multi_reduction <add>, %0, %cst [1] : vector<16x32xf32> to vector<16xf32>
    %4 = vector.shape_cast %3 : vector<16xf32> to vector<16x1xf32>
    %cst_5 = arith.constant 3.200000e+01 : f32
    %5 = vector.broadcast %cst_5 : f32 to vector<16x1xf32>
    %6 = arith.divf %4, %5 : vector<16x1xf32>
    %7 = vector.broadcast %6 : vector<16x1xf32> to vector<16x32xf32>
    %8 = arith.subf %0, %7 : vector<16x32xf32>
    %9 = arith.mulf %8, %8 : vector<16x32xf32>
    %cst_6 = arith.constant dense<0.000000e+00> : vector<16xf32>
    %10 = vector.multi_reduction <add>, %9, %cst_6 [1] : vector<16x32xf32> to vector<16xf32>
    %11 = vector.shape_cast %10 : vector<16xf32> to vector<16x1xf32>
    %cst_7 = arith.constant 3.100000e+01 : f32
    %12 = vector.broadcast %cst_7 : f32 to vector<16x1xf32>
    %13 = arith.divf %11, %12 : vector<16x1xf32>
    %14 = math.sqrt %13 : vector<16x1xf32>
    %cst_8 = arith.constant 9.99999997E-7 : f32
    %15 = vector.broadcast %cst_8 : f32 to vector<16x1xf32>
    %16 = arith.addf %14, %15 : vector<16x1xf32>
    %17 = tpu.reciprocal %16 : vector<16x1xf32> -> vector<16x1xf32>
    %18 = vector.broadcast %1 : vector<1x32xf32> to vector<16x32xf32>
    %19 = arith.mulf %18, %8 : vector<16x32xf32>
    %20 = vector.broadcast %17 : vector<16x1xf32> to vector<16x32xf32>
    %21 = arith.mulf %19, %20 : vector<16x32xf32>
    %22 = vector.broadcast %2 : vector<1x32xf32> to vector<16x32xf32>
    %23 = arith.addf %21, %22 : vector<16x32xf32>
    %24 = arith.truncf %23 : vector<16x32xf32> to vector<16x32xbf16>
    %c0_9 = arith.constant 0 : index
    %c0_10 = arith.constant 0 : index
    %25 = vector.load %arg4[%c0_9, %c0_10] : memref<32x96xbf16, #tpu.memory_space<vmem>>, vector<32x96xbf16>
    %cst_11 = arith.constant dense<0.000000e+00> : vector<16x96xf32>
    %26 = tpu.matmul %24, %25, %cst_11 {dimension_numbers = #tpu.dot_dimension_numbers<[1], [0], [0], [1], [0, 0, 1, 1], [], []>} : vector<16x32xbf16>, vector<32x96xbf16>, vector<16x96xf32> -> vector<16x96xf32>
    %c0_12 = arith.constant 0 : index
    %c0_13 = arith.constant 0 : index
    %27 = vector.load %arg5[%c0_12, %c0_13] : memref<1x96xf32, #tpu.memory_space<vmem>>, vector<1x96xf32>
    %28 = vector.broadcast %27 : vector<1x96xf32> to vector<16x96xf32>
    %29 = arith.addf %26, %28 : vector<16x96xf32>
    %30 = vector.extract_strided_slice %29 {offsets = [0, 0], sizes = [16, 32], strides = [1, 1]} : vector<16x96xf32> to vector<16x32xf32>
    %31 = arith.truncf %30 : vector<16x32xf32> to vector<16x32xbf16>
    %c0_14 = arith.constant 0 : index
    %c0_15 = arith.constant 0 : index
    %32 = vector.load %arg6[%c0_14, %c0_15] : memref<16x32xbf16, #tpu.memory_space<vmem>>, vector<16x32xbf16>
    tpu.vector_store %arg6[%c0_14, %c0_15], %31 {strides = array<i32>} : memref<16x32xbf16, #tpu.memory_space<vmem>>, vector<16x32xbf16>,
    %33 = vector.extract_strided_slice %29 {offsets = [0, 32], sizes = [16, 32], strides = [1, 1]} : vector<16x96xf32> to vector<16x32xf32>
    %34 = arith.truncf %33 : vector<16x32xf32> to vector<16x32xbf16>
    %c0_16 = arith.constant 0 : index
    %c0_17 = arith.constant 0 : index
    %35 = vector.load %arg7[%c0_16, %c0_17] : memref<16x32xbf16, #tpu.memory_space<vmem>>, vector<16x32xbf16>
    tpu.vector_store %arg7[%c0_16, %c0_17], %34 {strides = array<i32>} : memref<16x32xbf16, #tpu.memory_space<vmem>>, vector<16x32xbf16>,
    %36 = vector.extract_strided_slice %29 {offsets = [0, 64], sizes = [16, 32], strides = [1, 1]} : vector<16x96xf32> to vector<16x32xf32>
    %37 = arith.truncf %36 : vector<16x32xf32> to vector<16x32xbf16>
    %c0_18 = arith.constant 0 : index
    %c0_19 = arith.constant 0 : index
    %38 = vector.load %arg8[%c0_18, %c0_19] : memref<16x32xbf16, #tpu.memory_space<vmem>>, vector<16x32xbf16>
    tpu.vector_store %arg8[%c0_18, %c0_19], %37 {strides = array<i32>} : memref<16x32xbf16, #tpu.memory_space<vmem>>, vector<16x32xbf16>,
    return
  }
  func.func @transform_0(%arg0: i32) -> (i32, i32) {
    %c0_i32 = arith.constant 0 : i32
    %c0_i32_0 = arith.constant 0 : i32
    return %arg0, %c0_i32 : i32, i32
  }
  func.func @transform_1(%arg0: i32) -> (i32, i32) {
    %c0_i32 = arith.constant 0 : i32
    %c0_i32_0 = arith.constant 0 : i32
    %c0_i32_1 = arith.constant 0 : i32
    return %c0_i32, %c0_i32_0 : i32, i32
  }
  func.func @transform_2(%arg0: i32) -> (i32, i32) {
    %c0_i32 = arith.constant 0 : i32
    %c0_i32_0 = arith.constant 0 : i32
    %c0_i32_1 = arith.constant 0 : i32
    return %c0_i32, %c0_i32_0 : i32, i32
  }
  func.func @transform_3(%arg0: i32) -> (i32, i32) {
    %c0_i32 = arith.constant 0 : i32
    %c0_i32_0 = arith.constant 0 : i32
    %c0_i32_1 = arith.constant 0 : i32
    return %c0_i32, %c0_i32_0 : i32, i32
  }
  func.func @transform_4(%arg0: i32) -> (i32, i32) {
    %c0_i32 = arith.constant 0 : i32
    %c0_i32_0 = arith.constant 0 : i32
    %c0_i32_1 = arith.constant 0 : i32
    return %c0_i32, %c0_i32_0 : i32, i32
  }
  func.func @transform_5(%arg0: i32) -> (i32, i32) {
    %c0_i32 = arith.constant 0 : i32
    %c0_i32_0 = arith.constant 0 : i32
    return %arg0, %c0_i32 : i32, i32
  }
  func.func @transform_6(%arg0: i32) -> (i32, i32) {
    %c0_i32 = arith.constant 0 : i32
    %c0_i32_0 = arith.constant 0 : i32
    return %arg0, %c0_i32 : i32, i32
  }
  func.func @transform_7(%arg0: i32) -> (i32, i32) {
    %c0_i32 = arith.constant 0 : i32
    %c0_i32_0 = arith.constant 0 : i32
    return %arg0, %c0_i32 : i32, i32
  }
}

module attributes {stable_mosaic.version = 11 : i64} {
  func.func @_ln_kernel(%arg0: i32, %arg1: memref<16x32xf32, #tpu.memory_space<vmem>>, %arg2: memref<1x32xf32, #tpu.memory_space<vmem>>, %arg3: memref<1x32xf32, #tpu.memory_space<vmem>>, %arg4: memref<16x32xf32, #tpu.memory_space<vmem>>) attributes {dimension_semantics = [#tpu.dimension_semantics<parallel>], iteration_bounds = array<i64: 1>, scalar_prefetch = 0 : i64, scratch_operands = 0 : i64, tpu.core_type = #tpu.core_type<tc>, window_params = [{transform_indices = @transform_0, window_bounds = array<i64: 16, 32>}, {pipeline_mode = #tpu.pipeline_mode<synchronous>, transform_indices = @transform_1, window_bounds = array<i64: 1, 32>}, {pipeline_mode = #tpu.pipeline_mode<synchronous>, transform_indices = @transform_2, window_bounds = array<i64: 1, 32>}, {transform_indices = @transform_3, window_bounds = array<i64: 16, 32>}]} {
    %c0 = arith.constant 0 : index
    %c0_0 = arith.constant 0 : index
    %0 = vector.load %arg1[%c0, %c0_0] : memref<16x32xf32, #tpu.memory_space<vmem>>, vector<16x32xf32>
    %c0_1 = arith.constant 0 : index
    %c0_2 = arith.constant 0 : index
    %1 = vector.load %arg2[%c0_1, %c0_2] : memref<1x32xf32, #tpu.memory_space<vmem>>, vector<1x32xf32>
    %c0_3 = arith.constant 0 : index
    %c0_4 = arith.constant 0 : index
    %2 = vector.load %arg3[%c0_3, %c0_4] : memref<1x32xf32, #tpu.memory_space<vmem>>, vector<1x32xf32>
    %cst = arith.constant dense<0.000000e+00> : vector<16xf32>
    %3 = vector.multi_reduction <add>, %0, %cst [1] : vector<16x32xf32> to vector<16xf32>
    %4 = vector.shape_cast %3 : vector<16xf32> to vector<16x1xf32>
    %cst_5 = arith.constant 3.200000e+01 : f32
    %5 = vector.broadcast %cst_5 : f32 to vector<16x1xf32>
    %6 = arith.divf %4, %5 : vector<16x1xf32>
    %7 = vector.broadcast %6 : vector<16x1xf32> to vector<16x32xf32>
    %8 = arith.subf %0, %7 : vector<16x32xf32>
    %9 = arith.mulf %8, %8 : vector<16x32xf32>
    %cst_6 = arith.constant dense<0.000000e+00> : vector<16xf32>
    %10 = vector.multi_reduction <add>, %9, %cst_6 [1] : vector<16x32xf32> to vector<16xf32>
    %11 = vector.shape_cast %10 : vector<16xf32> to vector<16x1xf32>
    %cst_7 = arith.constant 3.100000e+01 : f32
    %12 = vector.broadcast %cst_7 : f32 to vector<16x1xf32>
    %13 = arith.divf %11, %12 : vector<16x1xf32>
    %14 = math.sqrt %13 : vector<16x1xf32>
    %cst_8 = arith.constant 9.99999997E-7 : f32
    %15 = vector.broadcast %cst_8 : f32 to vector<16x1xf32>
    %16 = arith.addf %14, %15 : vector<16x1xf32>
    %17 = tpu.reciprocal %16 : vector<16x1xf32> -> vector<16x1xf32>
    %18 = vector.broadcast %1 : vector<1x32xf32> to vector<16x32xf32>
    %19 = arith.mulf %18, %8 : vector<16x32xf32>
    %20 = vector.broadcast %17 : vector<16x1xf32> to vector<16x32xf32>
    %21 = arith.mulf %19, %20 : vector<16x32xf32>
    %22 = vector.broadcast %2 : vector<1x32xf32> to vector<16x32xf32>
    %23 = arith.addf %21, %22 : vector<16x32xf32>
    %c0_9 = arith.constant 0 : index
    %c0_10 = arith.constant 0 : index
    %24 = vector.load %arg4[%c0_9, %c0_10] : memref<16x32xf32, #tpu.memory_space<vmem>>, vector<16x32xf32>
    tpu.vector_store %arg4[%c0_9, %c0_10], %23 {strides = array<i32>} : memref<16x32xf32, #tpu.memory_space<vmem>>, vector<16x32xf32>,
    return
  }
  func.func @transform_0(%arg0: i32) -> (i32, i32) {
    %c0_i32 = arith.constant 0 : i32
    %c0_i32_0 = arith.constant 0 : i32
    return %arg0, %c0_i32 : i32, i32
  }
  func.func @transform_1(%arg0: i32) -> (i32, i32) {
    %c0_i32 = arith.constant 0 : i32
    %c0_i32_0 = arith.constant 0 : i32
    %c0_i32_1 = arith.constant 0 : i32
    return %c0_i32, %c0_i32_0 : i32, i32
  }
  func.func @transform_2(%arg0: i32) -> (i32, i32) {
    %c0_i32 = arith.constant 0 : i32
    %c0_i32_0 = arith.constant 0 : i32
    %c0_i32_1 = arith.constant 0 : i32
    return %c0_i32, %c0_i32_0 : i32, i32
  }
  func.func @transform_3(%arg0: i32) -> (i32, i32) {
    %c0_i32 = arith.constant 0 : i32
    %c0_i32_0 = arith.constant 0 : i32
    return %arg0, %c0_i32 : i32, i32
  }
}

</mosaic_0001>

<llo_original>
// kernel: encoder_forward.7
$region0: #{encoder_forward.7}
  #allocation0 [shape = 'u32[]', space=smem, size = 0x4, offset = 0x4, fixed_abs, tag = 'smem constant byte address 0x4 - core index']
  #allocation1 [shape = 'u32[144,128]{1,0:T(1,128)}', space=vmem, size = 0x12000, scoped, tag = 'internal scratch']
  %s0 = inlined_call_operand.hbm [shape: f32[16,32], index: 0, kind: input, shape index: {}]
  %s1 = inlined_call_operand.hbm [shape: f32[1,32], index: 1, kind: input, shape index: {}]
  %s2 = inlined_call_operand.hbm [shape: f32[1,32], index: 2, kind: input, shape index: {}]
  %s3 = inlined_call_operand.hbm [shape: bf16[32,96], index: 3, kind: input, shape index: {}]
  %s4 = inlined_call_operand.hbm [shape: f32[1,96], index: 4, kind: input, shape index: {}]
  %s5 = inlined_call_operand.hbm [shape: bf16[16,32], index: 5, kind: output, shape index: {0}]
  %s6 = inlined_call_operand.hbm [shape: bf16[16,32], index: 6, kind: output, shape index: {1}]
  %s7 = inlined_call_operand.hbm [shape: bf16[16,32], index: 7, kind: output, shape index: {2}]
  %8 = xla_tuple %s5, %s6, %s7
  %s9 = sld [smem:[#allocation0]]
  $region66: #{encoder_forward.7} parent=0
    _
  %s11 = ssub.s32 1, %s9
  %s12 = scalar_select 0, %s11, %s9
  $region1: #{encoder_forward.7} parent=0
    #allocation2 [shape = 'u8[8192]{0}', space=vmem, size = 0x2000, scoped, tag = 'input window, operand 0, single buffered']
    #allocation3 [shape = 's32[1]{0}', space=sflag, size = 0x4, scoped, tag = 'scoped memory for encoder_forward.7']
    #allocation4 [shape = 's32[1]{0}', space=sflag, size = 0x4, scoped, tag = 'scoped memory for encoder_forward.7']
    #allocation5 [shape = 'u8[512]{0}', space=vmem, size = 0x400, scoped, tag = 'input window, operand 1, single buffered']
    #allocation6 [shape = 's32[1]{0}', space=sflag, size = 0x4, scoped, tag = 'scoped memory for encoder_forward.7']
    #allocation7 [shape = 'u8[512]{0}', space=vmem, size = 0x400, scoped, tag = 'input window, operand 2, single buffered']
    #allocation8 [shape = 'u8[8192]{0}', space=vmem, size = 0x2000, scoped, tag = 'input window, operand 3, single buffered']
    #allocation9 [shape = 's32[1]{0}', space=sflag, size = 0x4, scoped, tag = 'scoped memory for encoder_forward.7']
    #allocation10 [shape = 'u8[512]{0}', space=vmem, size = 0x400, scoped, tag = 'input window, operand 4, single buffered']
    #allocation11 [shape = 'u8[4096]{0}', space=vmem, size = 0x1000, scoped, tag = 'output window, operand 0, single buffered']
    #allocation12 [shape = 'u8[4096]{0}', space=vmem, size = 0x1000, scoped, tag = 'output window, operand 1, single buffered']
    #allocation13 [shape = 's32[1]{0}', space=sflag, size = 0x4, scoped, tag = 'scoped memory for encoder_forward.7']
    #allocation14 [shape = 'u8[4096]{0}', space=vmem, size = 0x1000, scoped, tag = 'output window, operand 2, single buffered']
    %13 = vsyncpa [#allocation3], 0
    %14 = vsyncpa [#allocation6], 0
    %15 = vsyncpa [#allocation9], 0
    %16 = vsyncpa [#allocation4], 0
    %17 = vsyncpa [#allocation13], 0
    // Predicated region
    $region2: #{encoder_forward.7} parent=1 // pred_check
      _
    $region3: #{encoder_forward.7} parent=1 // pred_check_branch
      %19 = sbr.rel (0) target = $region5
    $region4: #{encoder_forward.7} parent=1 // pred_region
      %s21 = ssub.s32 256, 256
      %22 = vsyncadd [#allocation3], %s21
      %s23 = sshll.u32 [#allocation2], 4
      %s24 = int_to_ptr.vmem [resolvable:$true] %s23
      %29 = dma.hbm_to_vmem [thread:$0]  %s0, 256, %s24, [#allocation3], 128, 128, 8
    $region5: #{encoder_forward.7} parent=1 // pred_fallthru
      _
    // Predicated region
    $region6: #{encoder_forward.7} parent=1 // pred_check
      _
    $region7: #{encoder_forward.7} parent=1 // pred_check_branch
      %31 = sbr.rel (0) target = $region9
    $region8: #{encoder_forward.7} parent=1 // pred_region
      %s33 = ssub.s32 16, 16
      %34 = vsyncadd [#allocation6], %s33
      %s36 = sshll.u32 [#allocation5], 4
      %s37 = int_to_ptr.vmem [resolvable:$true] %s36
      %39 = dma.hbm_to_vmem [thread:$0]  %s1, 16, %s37, [#allocation6]
    $region9: #{encoder_forward.7} parent=1 // pred_fallthru
      _
    // Predicated region
    $region10: #{encoder_forward.7} parent=1 // pred_check
      _
    $region11: #{encoder_forward.7} parent=1 // pred_check_branch
      %41 = sbr.rel (0) target = $region13
    $region12: #{encoder_forward.7} parent=1 // pred_region
      %s43 = ssub.s32 16, 16
      %44 = vsyncadd [#allocation6], %s43
      %s46 = sshll.u32 [#allocation7], 4
      %s47 = int_to_ptr.vmem [resolvable:$true] %s46
      %49 = dma.hbm_to_vmem [thread:$0]  %s2, 16, %s47, [#allocation6]
    $region13: #{encoder_forward.7} parent=1 // pred_fallthru
      _
    // Predicated region
    $region14: #{encoder_forward.7} parent=1 // pred_check
      _
    $region15: #{encoder_forward.7} parent=1 // pred_check_branch
      %51 = sbr.rel (0) target = $region17
    $region16: #{encoder_forward.7} parent=1 // pred_region
      %s53 = ssub.s32 256, 256
      %54 = vsyncadd [#allocation9], %s53
      %s55 = sshll.u32 [#allocation8], 4
      %s56 = int_to_ptr.vmem [resolvable:$true] %s55
      %61 = dma.hbm_to_vmem [thread:$0]  %s3, 256, %s56, [#allocation9], 64, 64, 4
    $region17: #{encoder_forward.7} parent=1 // pred_fallthru
      _
    // Predicated region
    $region18: #{encoder_forward.7} parent=1 // pred_check
      _
    $region19: #{encoder_forward.7} parent=1 // pred_check_branch
      %63 = sbr.rel (0) target = $region21
    $region20: #{encoder_forward.7} parent=1 // pred_region
      %s65 = ssub.s32 16, 16
      %66 = vsyncadd [#allocation9], %s65
      %s68 = sshll.u32 [#allocation10], 4
      %s69 = int_to_ptr.vmem [resolvable:$true] %s68
      %71 = dma.hbm_to_vmem [thread:$0]  %s4, 16, %s69, [#allocation9]
    $region21: #{encoder_forward.7} parent=1 // pred_fallthru
      _
    // Predicated region
    $region22: #{encoder_forward.7} parent=1 // pred_check
      _
    $region23: #{encoder_forward.7} parent=1 // pred_check_branch
      %73 = sbr.rel (0) target = $region25
    $region24: #{encoder_forward.7} parent=1 // pred_region
      %74 = dma.done [#allocation3], 256
    $region25: #{encoder_forward.7} parent=1 // pred_fallthru
      _
    // Predicated region
    $region26: #{encoder_forward.7} parent=1 // pred_check
      _
    $region27: #{encoder_forward.7} parent=1 // pred_check_branch
      %76 = sbr.rel (0) target = $region29
    $region28: #{encoder_forward.7} parent=1 // pred_region
      %77 = dma.done [#allocation6], 16
    $region29: #{encoder_forward.7} parent=1 // pred_fallthru
      _
    // Predicated region
    $region30: #{encoder_forward.7} parent=1 // pred_check
      _
    $region31: #{encoder_forward.7} parent=1 // pred_check_branch
      %79 = sbr.rel (0) target = $region33
    $region32: #{encoder_forward.7} parent=1 // pred_region
      %80 = dma.done [#allocation6], 16
    $region33: #{encoder_forward.7} parent=1 // pred_fallthru
      _
    // Predicated region
    $region34: #{encoder_forward.7} parent=1 // pred_check
      _
    $region35: #{encoder_forward.7} parent=1 // pred_check_branch
      %82 = sbr.rel (0) target = $region37
    $region36: #{encoder_forward.7} parent=1 // pred_region
      %83 = dma.done [#allocation9], 256
    $region37: #{encoder_forward.7} parent=1 // pred_fallthru
      _
    // Predicated region
    $region38: #{encoder_forward.7} parent=1 // pred_check
      _
    $region39: #{encoder_forward.7} parent=1 // pred_check_branch
      %85 = sbr.rel (0) target = $region41
    $region40: #{encoder_forward.7} parent=1 // pred_region
      %86 = dma.done [#allocation9], 16
    $region41: #{encoder_forward.7} parent=1 // pred_fallthru
      _
    %v88 = vld [vmem:[#allocation2] sm:$0xff]
    %v89 = vld [vmem:[#allocation2 + $0x8] sm:$0xff]
    %v90 = vld [vmem:[#allocation5] sm:$0x1]
    %v91 = vld [vmem:[#allocation7] sm:$0x1]
    %vm92 = vcmask 261120
    %v93 = vsel %vm92, %v88, 0.0
    %94 = vadd.xlane.f32.xlu0 %v93
    %v95 = vpop.xlane.xlu0 %94
    %v96 = vsel %vm92, %v89, 0.0
    %97 = vadd.xlane.f32.xlu0 %v96
    %v98 = vpop.xlane.xlu0 %97
    %v99 = vrcp.pop 32.0
    %v100 = vmul.f32 %v95, %v99
    %v101 = vmul.f32 %v98, %v99
    %v102 = vsub.f32 %v88, %v100
    %v103 = vsub.f32 %v89, %v101
    %v104 = vmul.f32 %v102, %v102
    %v105 = vmul.f32 %v103, %v103
    %v106 = vsel %vm92, %v104, 0.0
    %107 = vadd.xlane.f32.xlu0 %v106
    %v108 = vpop.xlane.xlu0 %107
    %v109 = vsel %vm92, %v105, 0.0
    %110 = vadd.xlane.f32.xlu0 %v109
    %v111 = vpop.xlane.xlu0 %110
    %v112 = vrcp.pop 31.0
    %v113 = vmul.f32 %v108, %v112
    %v114 = vmul.f32 %v111, %v112
    %v115 = vrsqrt.pop %v113
    %v116 = vmul.f32 %v113, %v115
    %vm117 = vcmp.eq.f32.partialorder %v113, inf
    %v118 = vsel %vm117, %v113, %v116
    %vm119 = vcmp.eq.f32.partialorder %v113, 0.0
    %v120 = vand.u32 %v113, 2147483648
    %v121 = vsel %vm119, %v120, %v118
    %v122 = vrsqrt.pop %v114
    %v123 = vmul.f32 %v114, %v122
    %vm124 = vcmp.eq.f32.partialorder %v114, inf
    %v125 = vsel %vm124, %v114, %v123
    %vm126 = vcmp.eq.f32.partialorder %v114, 0.0
    %v127 = vand.u32 %v114, 2147483648
    %v128 = vsel %vm126, %v127, %v125
    %v129 = vadd.f32 %v121, 1e-06
    %v130 = vadd.f32 %v128, 1e-06
    %v131 = vrcp.pop %v129
    %v132 = vrcp.pop %v130
    %v134 = vlaneseq
    %v135 = vshrl.u32 %v134, 7
    %v136 = vsub.s32 0, %v135
    %v137 = vrot.slane %v90, %v136
    %v139 = vmul.f32 %v137, %v102
    %v140 = vmul.f32 %v137, %v103
    %v141 = vmul.f32 %v139, %v131
    %v142 = vmul.f32 %v140, %v132
    %v144 = vlaneseq
    %v145 = vshrl.u32 %v144, 7
    %v146 = vsub.s32 0, %v145
    %v147 = vrot.slane %v91, %v146
    %v149 = vadd.f32 %v141, %v147
    %v150 = vadd.f32 %v142, %v147
    %v151 = vpack.c.bf16 %v150, %v149
    %v152 = vld [vmem:[#allocation8] sm:$0xf]
    %v153 = vld [vmem:[#allocation8 + $0x4] sm:$0xf]
    %v154 = vld [vmem:[#allocation8 + $0x8] sm:$0xf]
    %v155 = vld [vmem:[#allocation8 + $0xc] sm:$0xf]
    %v156 = vld [vmem:[#allocation10] sm:$0x1]
    %v158 = vlaneseq
    %v159 = vshrl.u32 %v158, 7
    %v160 = vsub.s32 0, %v159
    %v161 = vrot.slane %v156, %v160
    %v167 = vunpack.c.l.b16 %v152
    %v168 = vunpack.c.l.b16 %v153
    %v169 = vunpack.c.l.b16 %v154
    %v170 = vunpack.c.l.b16 %v155
    %v171 = vpack.c.b16 %v168, %v167
    %v172 = vpack.c.b16 %v170, %v169
    %v176 = vsel %vm92, %v151, 0
    %178 = vmatprep.subr.bf16.mxu0 0
    %179 = vmatpush1.bf16.msra.mxu0 %v171
    %180 = vmatprep.subr.bf16.mxu0 0
    %181 = vmatpush1.bf16.msra.mxu0 %v172
    %182 = vmatprep.subr.bf16.mxu0 0
    %183 = vmatpush1.bf16.msra.mxu0 0
    %184 = vmatprep.subr.bf16.mxu0 0
    %185 = vmatpush1.bf16.msra.mxu0 0
    %186 = vmatprep.subr.bf16.mxu0 0
    %187 = vmatpush1.bf16.msra.mxu0 0
    %188 = vmatprep.subr.bf16.mxu0 0
    %189 = vmatpush1.bf16.msra.mxu0 0
    %190 = vmatprep.subr.bf16.mxu0 0
    %191 = vmatpush1.bf16.msra.mxu0 0
    %192 = vmatprep.subr.bf16.mxu0 0
    %193 = vmatpush1.bf16.msra.mxu0 0
    %194 = vmatprep.subr.bf16.mxu0 0
    %195 = vmatpush1.bf16.msra.mxu0 0
    %196 = vmatprep.subr.bf16.mxu0 0
    %197 = vmatpush1.bf16.msra.mxu0 0
    %198 = vmatprep.subr.bf16.mxu0 0
    %199 = vmatpush1.bf16.msra.mxu0 0
    %200 = vmatprep.subr.bf16.mxu0 0
    %201 = vmatpush1.bf16.msra.mxu0 0
    %202 = vmatprep.subr.bf16.mxu0 0
    %203 = vmatpush1.bf16.msra.mxu0 0
    %204 = vmatprep.subr.bf16.mxu0 0
    %205 = vmatpush1.bf16.msra.mxu0 0
    %206 = vmatprep.subr.bf16.mxu0 0
    %207 = vmatpush1.bf16.msra.mxu0 0
    %208 = vmatprep.subr.bf16.mxu0 0
    %209 = vmatpush1.bf16.msra.mxu0 0
    %210 = vmatprep.mubr.bf16.mxu0 0
    %211 = vmatmul.mubr.bf16.gmra.mrb[0].mxu0 %v176
    %v212 = vpop.f32.mrb[0].mxu0
    %v213 = vadd.f32 %v161, %v212
    %v214 = vpop.f32.mrb[0].mxu0
    %v215 = vpop.f32.mrb[0].mxu0
    %v216 = vadd.f32 %v161, %v215
    %v217 = vpop.f32.mrb[0].mxu0
    %218 = vdwg.mxu0
    %v219 = vpack.c.bf16 %v216, %v213
    %v221 = vunpack.c.l.b16 %v219
    %v222 = vunpack.c.h.b16 %v219
    %v223 = vpack.c.b16 %v221, %v221
    %v224 = vpack.c.b16 %v222, %v222
    %vm227 = vcmask 257024
    %228 = vst.msk [vmem:[#allocation11] sm:$0xf] %vm227, %v223
    %229 = vst.msk [vmem:[#allocation11 + $0x4] sm:$0xf] %vm227, %v224
    %230 = vrot.lane.b32.xlu0 %v223, 96
    %v231 = vpop.permute.xlu0 %230
    %232 = vrot.lane.b32.xlu0 %v224, 96
    %v233 = vpop.permute.xlu0 %232
    %236 = vst.msk [vmem:[#allocation12] sm:$0xf] %vm227, %v231
    %237 = vst.msk [vmem:[#allocation12 + $0x4] sm:$0xf] %vm227, %v233
    %238 = vrot.lane.b32.xlu0 %v223, 64
    %v239 = vpop.permute.xlu0 %238
    %240 = vrot.lane.b32.xlu0 %v224, 64
    %v241 = vpop.permute.xlu0 %240
    %244 = vst.msk [vmem:[#allocation14] sm:$0xf] %vm227, %v239
    %245 = vst.msk [vmem:[#allocation14 + $0x4] sm:$0xf] %vm227, %v241
    // Predicated region
    $region42: #{encoder_forward.7} parent=1 // pred_check
      _
    $region43: #{encoder_forward.7} parent=1 // pred_check_branch
      %247 = sbr.rel (0) target = $region45
    $region44: #{encoder_forward.7} parent=1 // pred_region
      %s249 = ssub.s32 128, 128
      %250 = vsyncadd [#allocation4], %s249
      %s251 = sshll.u32 [#allocation11], 4
      %s252 = int_to_ptr.vmem [resolvable:$true] %s251
      %257 = dma.vmem_to_hbm [thread:$0]  %s252, 128, %s5, [#allocation4], 64, 64, 4
    $region45: #{encoder_forward.7} parent=1 // pred_fallthru
      _
    // Predicated region
    $region46: #{encoder_forward.7} parent=1 // pred_check
      _
    $region47: #{encoder_forward.7} parent=1 // pred_check_branch
      %259 = sbr.rel (0) target = $region49
    $region48: #{encoder_forward.7} parent=1 // pred_region
      %s261 = ssub.s32 128, 128
      %262 = vsyncadd [#allocation13], %s261
      %s263 = sshll.u32 [#allocation12], 4
      %s264 = int_to_ptr.vmem [resolvable:$true] %s263
      %269 = dma.vmem_to_hbm [thread:$0]  %s264, 128, %s6, [#allocation13], 64, 64, 4
    $region49: #{encoder_forward.7} parent=1 // pred_fallthru
      _
    // Predicated region
    $region50: #{encoder_forward.7} parent=1 // pred_check
      _
    $region51: #{encoder_forward.7} parent=1 // pred_check_branch
      %271 = sbr.rel (0) target = $region53
    $region52: #{encoder_forward.7} parent=1 // pred_region
      %s273 = ssub.s32 128, 128
      %274 = vsyncadd [#allocation13], %s273
      %s275 = sshll.u32 [#allocation14], 4
      %s276 = int_to_ptr.vmem [resolvable:$true] %s275
      %281 = dma.vmem_to_hbm [thread:$0]  %s276, 128, %s7, [#allocation13], 64, 64, 4
    $region53: #{encoder_forward.7} parent=1 // pred_fallthru
      _
    // Predicated region
    $region54: #{encoder_forward.7} parent=1 // pred_check
      _
    $region55: #{encoder_forward.7} parent=1 // pred_check_branch
      %283 = sbr.rel (0) target = $region57
    $region56: #{encoder_forward.7} parent=1 // pred_region
      %284 = dma.done [#allocation4], 128
    $region57: #{encoder_forward.7} parent=1 // pred_fallthru
      _
    // Predicated region
    $region58: #{encoder_forward.7} parent=1 // pred_check
      _
    $region59: #{encoder_forward.7} parent=1 // pred_check_branch
      %286 = sbr.rel (0) target = $region61
    $region60: #{encoder_forward.7} parent=1 // pred_region
      %287 = dma.done [#allocation13], 128
    $region61: #{encoder_forward.7} parent=1 // pred_fallthru
      _
    // Predicated region
    $region62: #{encoder_forward.7} parent=1 // pred_check
      _
    $region63: #{encoder_forward.7} parent=1 // pred_check_branch
      %289 = sbr.rel (0) target = $region65
    $region64: #{encoder_forward.7} parent=1 // pred_region
      %290 = dma.done [#allocation13], 128
    $region65: #{encoder_forward.7} parent=1 // pred_fallthru
      _
    %291 = vsyncpa [#allocation3], 1
    %292 = vsyncpa [#allocation6], 1
    %293 = vsyncpa [#allocation9], 1
    %294 = vsyncpa [#allocation4], 1
    %295 = vsyncpa [#allocation13], 1

// kernel: encoder_forward.9
$region0: #{encoder_forward.9}
  #allocation0 [shape = 'u32[]', space=smem, size = 0x4, offset = 0x4, fixed_abs, tag = 'smem constant byte address 0x4 - core index']
  #allocation1 [shape = 'u32[144,128]{1,0:T(1,128)}', space=vmem, size = 0x12000, scoped, tag = 'internal scratch']
  %s0 = inlined_call_operand.hbm [shape: f32[16,32], index: 0, kind: input, shape index: {}, may-alias: {0,7}]
  %s1 = inlined_call_operand.hbm [shape: f32[1,32], index: 1, kind: input, shape index: {}]
  %s2 = inlined_call_operand.hbm [shape: f32[1,32], index: 2, kind: input, shape index: {}]
  %s3 = inlined_call_operand.hbm [shape: bf16[32,64], index: 3, kind: input, shape index: {}]
  %s4 = inlined_call_operand.hbm [shape: f32[1,64], index: 4, kind: input, shape index: {}]
  %s5 = inlined_call_operand.hbm [shape: bf16[64,32], index: 5, kind: input, shape index: {}]
  %s6 = inlined_call_operand.hbm [shape: f32[1,32], index: 6, kind: input, shape index: {}]
  %s7 = inlined_call_operand.hbm [shape: f32[16,32], index: 7, kind: output, shape index: {}, may-alias: {0,7}]
  %s8 = sld [smem:[#allocation0]]
  $region66: #{encoder_forward.9} parent=0
    _
  %s10 = ssub.s32 1, %s8
  %s11 = scalar_select 0, %s10, %s8
  $region1: #{encoder_forward.9} parent=0
    #allocation2 [shape = 'u8[8192]{0}', space=vmem, size = 0x2000, scoped, tag = 'input window, operand 0, single buffered']
    #allocation3 [shape = 's32[1]{0}', space=sflag, size = 0x4, scoped, tag = 'scoped memory for encoder_forward.9']
    #allocation4 [shape = 's32[1]{0}', space=sflag, size = 0x4, scoped, tag = 'scoped memory for encoder_forward.9']
    #allocation5 [shape = 'u8[512]{0}', space=vmem, size = 0x400, scoped, tag = 'input window, operand 1, single buffered']
    #allocation6 [shape = 's32[1]{0}', space=sflag, size = 0x4, scoped, tag = 'scoped memory for encoder_forward.9']
    #allocation7 [shape = 'u8[512]{0}', space=vmem, size = 0x400, scoped, tag = 'input window, operand 2, single buffered']
    #allocation8 [shape = 'u8[8192]{0}', space=vmem, size = 0x2000, scoped, tag = 'input window, operand 3, single buffered']
    #allocation9 [shape = 's32[1]{0}', space=sflag, size = 0x4, scoped, tag = 'scoped memory for encoder_forward.9']
    #allocation10 [shape = 'u8[512]{0}', space=vmem, size = 0x400, scoped, tag = 'input window, operand 4, single buffered']
    #allocation11 [shape = 'u8[16384]{0}', space=vmem, size = 0x4000, scoped, tag = 'input window, operand 5, single buffered']
    #allocation12 [shape = 's32[1]{0}', space=sflag, size = 0x4, scoped, tag = 'scoped memory for encoder_forward.9']
    #allocation13 [shape = 'u8[512]{0}', space=vmem, size = 0x400, scoped, tag = 'input window, operand 6, single buffered']
    #allocation14 [shape = 'u8[8192]{0}', space=vmem, size = 0x2000, scoped, tag = 'output window, operand 0, single buffered']
    %12 = vsyncpa [#allocation3], 0
    %13 = vsyncpa [#allocation6], 0
    %14 = vsyncpa [#allocation9], 0
    %15 = vsyncpa [#allocation12], 0
    %16 = vsyncpa [#allocation4], 0
    // Predicated region
    $region2: #{encoder_forward.9} parent=1 // pred_check
      _
    $region3: #{encoder_forward.9} parent=1 // pred_check_branch
      %18 = sbr.rel (0) target = $region5
    $region4: #{encoder_forward.9} parent=1 // pred_region
      %s20 = ssub.s32 256, 256
      %21 = vsyncadd [#allocation3], %s20
      %s22 = sshll.u32 [#allocation2], 4
      %s23 = int_to_ptr.vmem [resolvable:$true] %s22
      %28 = dma.hbm_to_vmem [thread:$0]  %s0, 256, %s23, [#allocation3], 128, 128, 8
    $region5: #{encoder_forward.9} parent=1 // pred_fallthru
      _
    // Predicated region
    $region6: #{encoder_forward.9} parent=1 // pred_check
      _
    $region7: #{encoder_forward.9} parent=1 // pred_check_branch
      %30 = sbr.rel (0) target = $region9
    $region8: #{encoder_forward.9} parent=1 // pred_region
      %s32 = ssub.s32 16, 16
      %33 = vsyncadd [#allocation6], %s32
      %s35 = sshll.u32 [#allocation5], 4
      %s36 = int_to_ptr.vmem [resolvable:$true] %s35
      %38 = dma.hbm_to_vmem [thread:$0]  %s1, 16, %s36, [#allocation6]
    $region9: #{encoder_forward.9} parent=1 // pred_fallthru
      _
    // Predicated region
    $region10: #{encoder_forward.9} parent=1 // pred_check
      _
    $region11: #{encoder_forward.9} parent=1 // pred_check_branch
      %40 = sbr.rel (0) target = $region13
    $region12: #{encoder_forward.9} parent=1 // pred_region
      %s42 = ssub.s32 16, 16
      %43 = vsyncadd [#allocation6], %s42
      %s45 = sshll.u32 [#allocation7], 4
      %s46 = int_to_ptr.vmem [resolvable:$true] %s45
      %48 = dma.hbm_to_vmem [thread:$0]  %s2, 16, %s46, [#allocation6]
    $region13: #{encoder_forward.9} parent=1 // pred_fallthru
      _
    // Predicated region
    $region14: #{encoder_forward.9} parent=1 // pred_check
      _
    $region15: #{encoder_forward.9} parent=1 // pred_check_branch
      %50 = sbr.rel (0) target = $region17
    $region16: #{encoder_forward.9} parent=1 // pred_region
      %s52 = ssub.s32 256, 256
      %53 = vsyncadd [#allocation9], %s52
      %s54 = sshll.u32 [#allocation8], 4
      %s55 = int_to_ptr.vmem [resolvable:$true] %s54
      %60 = dma.hbm_to_vmem [thread:$0]  %s3, 256, %s55, [#allocation9], 64, 64, 4
    $region17: #{encoder_forward.9} parent=1 // pred_fallthru
      _
    // Predicated region
    $region18: #{encoder_forward.9} parent=1 // pred_check
      _
    $region19: #{encoder_forward.9} parent=1 // pred_check_branch
      %62 = sbr.rel (0) target = $region21
    $region20: #{encoder_forward.9} parent=1 // pred_region
      %s64 = ssub.s32 16, 16
      %65 = vsyncadd [#allocation9], %s64
      %s67 = sshll.u32 [#allocation10], 4
      %s68 = int_to_ptr.vmem [resolvable:$true] %s67
      %70 = dma.hbm_to_vmem [thread:$0]  %s4, 16, %s68, [#allocation9]
    $region21: #{encoder_forward.9} parent=1 // pred_fallthru
      _
    // Predicated region
    $region22: #{encoder_forward.9} parent=1 // pred_check
      _
    $region23: #{encoder_forward.9} parent=1 // pred_check_branch
      %72 = sbr.rel (0) target = $region25
    $region24: #{encoder_forward.9} parent=1 // pred_region
      %s74 = ssub.s32 512, 512
      %75 = vsyncadd [#allocation12], %s74
      %s76 = sshll.u32 [#allocation11], 4
      %s77 = int_to_ptr.vmem [resolvable:$true] %s76
      %82 = dma.hbm_to_vmem [thread:$0]  %s5, 512, %s77, [#allocation12], 64, 64, 4
    $region25: #{encoder_forward.9} parent=1 // pred_fallthru
      _
    // Predicated region
    $region26: #{encoder_forward.9} parent=1 // pred_check
      _
    $region27: #{encoder_forward.9} parent=1 // pred_check_branch
      %84 = sbr.rel (0) target = $region29
    $region28: #{encoder_forward.9} parent=1 // pred_region
      %s86 = ssub.s32 16, 16
      %87 = vsyncadd [#allocation12], %s86
      %s89 = sshll.u32 [#allocation13], 4
      %s90 = int_to_ptr.vmem [resolvable:$true] %s89
      %92 = dma.hbm_to_vmem [thread:$0]  %s6, 16, %s90, [#allocation12]
    $region29: #{encoder_forward.9} parent=1 // pred_fallthru
      _
    // Predicated region
    $region30: #{encoder_forward.9} parent=1 // pred_check
      _
    $region31: #{encoder_forward.9} parent=1 // pred_check_branch
      %94 = sbr.rel (0) target = $region33
    $region32: #{encoder_forward.9} parent=1 // pred_region
      %95 = dma.done [#allocation3], 256
    $region33: #{encoder_forward.9} parent=1 // pred_fallthru
      _
    // Predicated region
    $region34: #{encoder_forward.9} parent=1 // pred_check
      _
    $region35: #{encoder_forward.9} parent=1 // pred_check_branch
      %97 = sbr.rel (0) target = $region37
    $region36: #{encoder_forward.9} parent=1 // pred_region
      %98 = dma.done [#allocation6], 16
    $region37: #{encoder_forward.9} parent=1 // pred_fallthru
      _
    // Predicated region
    $region38: #{encoder_forward.9} parent=1 // pred_check
      _
    $region39: #{encoder_forward.9} parent=1 // pred_check_branch
      %100 = sbr.rel (0) target = $region41
    $region40: #{encoder_forward.9} parent=1 // pred_region
      %101 = dma.done [#allocation6], 16
    $region41: #{encoder_forward.9} parent=1 // pred_fallthru
      _
    // Predicated region
    $region42: #{encoder_forward.9} parent=1 // pred_check
      _
    $region43: #{encoder_forward.9} parent=1 // pred_check_branch
      %103 = sbr.rel (0) target = $region45
    $region44: #{encoder_forward.9} parent=1 // pred_region
      %104 = dma.done [#allocation9], 256
    $region45: #{encoder_forward.9} parent=1 // pred_fallthru
      _
    // Predicated region
    $region46: #{encoder_forward.9} parent=1 // pred_check
      _
    $region47: #{encoder_forward.9} parent=1 // pred_check_branch
      %106 = sbr.rel (0) target = $region49
    $region48: #{encoder_forward.9} parent=1 // pred_region
      %107 = dma.done [#allocation9], 16
    $region49: #{encoder_forward.9} parent=1 // pred_fallthru
      _
    // Predicated region
    $region50: #{encoder_forward.9} parent=1 // pred_check
      _
    $region51: #{encoder_forward.9} parent=1 // pred_check_branch
      %109 = sbr.rel (0) target = $region53
    $region52: #{encoder_forward.9} parent=1 // pred_region
      %110 = dma.done [#allocation12], 512
    $region53: #{encoder_forward.9} parent=1 // pred_fallthru
      _
    // Predicated region
    $region54: #{encoder_forward.9} parent=1 // pred_check
      _
    $region55: #{encoder_forward.9} parent=1 // pred_check_branch
      %112 = sbr.rel (0) target = $region57
    $region56: #{encoder_forward.9} parent=1 // pred_region
      %113 = dma.done [#allocation12], 16
    $region57: #{encoder_forward.9} parent=1 // pred_fallthru
      _
    %v115 = vld [vmem:[#allocation2] sm:$0xff]
    %v116 = vld [vmem:[#allocation2 + $0x8] sm:$0xff]
    %v117 = vld [vmem:[#allocation5] sm:$0x1]
    %v118 = vld [vmem:[#allocation7] sm:$0x1]
    %vm119 = vcmask 261120
    %v120 = vsel %vm119, %v115, 0.0
    %121 = vadd.xlane.f32.xlu0 %v120
    %v122 = vpop.xlane.xlu0 %121
    %v123 = vsel %vm119, %v116, 0.0
    %124 = vadd.xlane.f32.xlu0 %v123
    %v125 = vpop.xlane.xlu0 %124
    %v126 = vrcp.pop 32.0
    %v127 = vmul.f32 %v122, %v126
    %v128 = vmul.f32 %v125, %v126
    %v129 = vsub.f32 %v115, %v127
    %v130 = vsub.f32 %v116, %v128
    %v131 = vmul.f32 %v129, %v129
    %v132 = vmul.f32 %v130, %v130
    %v133 = vsel %vm119, %v131, 0.0
    %134 = vadd.xlane.f32.xlu0 %v133
    %v135 = vpop.xlane.xlu0 %134
    %v136 = vsel %vm119, %v132, 0.0
    %137 = vadd.xlane.f32.xlu0 %v136
    %v138 = vpop.xlane.xlu0 %137
    %v139 = vrcp.pop 31.0
    %v140 = vmul.f32 %v135, %v139
    %v141 = vmul.f32 %v138, %v139
    %v142 = vrsqrt.pop %v140
    %v143 = vmul.f32 %v140, %v142
    %vm144 = vcmp.eq.f32.partialorder %v140, inf
    %v145 = vsel %vm144, %v140, %v143
    %vm146 = vcmp.eq.f32.partialorder %v140, 0.0
    %v147 = vand.u32 %v140, 2147483648
    %v148 = vsel %vm146, %v147, %v145
    %v149 = vrsqrt.pop %v141
    %v150 = vmul.f32 %v141, %v149
    %vm151 = vcmp.eq.f32.partialorder %v141, inf
    %v152 = vsel %vm151, %v141, %v150
    %vm153 = vcmp.eq.f32.partialorder %v141, 0.0
    %v154 = vand.u32 %v141, 2147483648
    %v155 = vsel %vm153, %v154, %v152
    %v156 = vadd.f32 %v148, 1e-06
    %v157 = vadd.f32 %v155, 1e-06
    %v158 = vrcp.pop %v156
    %v159 = vrcp.pop %v157
    %v161 = vlaneseq
    %v162 = vshrl.u32 %v161, 7
    %v163 = vsub.s32 0, %v162
    %v164 = vrot.slane %v117, %v163
    %v166 = vmul.f32 %v164, %v129
    %v167 = vmul.f32 %v164, %v130
    %v168 = vmul.f32 %v166, %v158
    %v169 = vmul.f32 %v167, %v159
    %v171 = vlaneseq
    %v172 = vshrl.u32 %v171, 7
    %v173 = vsub.s32 0, %v172
    %v174 = vrot.slane %v118, %v173
    %v176 = vadd.f32 %v168, %v174
    %v177 = vadd.f32 %v169, %v174
    %v178 = vpack.c.bf16 %v177, %v176
    %v179 = vld [vmem:[#allocation8] sm:$0xf]
    %v180 = vld [vmem:[#allocation8 + $0x4] sm:$0xf]
    %v181 = vld [vmem:[#allocation8 + $0x8] sm:$0xf]
    %v182 = vld [vmem:[#allocation8 + $0xc] sm:$0xf]
    %v183 = vld [vmem:[#allocation10] sm:$0x1]
    %v185 = vlaneseq
    %v186 = vshrl.u32 %v185, 7
    %v187 = vsub.s32 0, %v186
    %v188 = vrot.slane %v183, %v187
    %v194 = vunpack.c.l.b16 %v179
    %v195 = vunpack.c.l.b16 %v180
    %v196 = vunpack.c.l.b16 %v181
    %v197 = vunpack.c.l.b16 %v182
    %v198 = vpack.c.b16 %v195, %v194
    %v199 = vpack.c.b16 %v197, %v196
    %v203 = vsel %vm119, %v178, 0
    %205 = vmatprep.subr.bf16.mxu0 0
    %206 = vmatpush1.bf16.msra.mxu0 %v198
    %207 = vmatprep.subr.bf16.mxu0 0
    %208 = vmatpush1.bf16.msra.mxu0 %v199
    %209 = vmatprep.subr.bf16.mxu0 0
    %210 = vmatpush1.bf16.msra.mxu0 0
    %211 = vmatprep.subr.bf16.mxu0 0
    %212 = vmatpush1.bf16.msra.mxu0 0
    %213 = vmatprep.subr.bf16.mxu0 0
    %214 = vmatpush1.bf16.msra.mxu0 0
    %215 = vmatprep.subr.bf16.mxu0 0
    %216 = vmatpush1.bf16.msra.mxu0 0
    %217 = vmatprep.subr.bf16.mxu0 0
    %218 = vmatpush1.bf16.msra.mxu0 0
    %219 = vmatprep.subr.bf16.mxu0 0
    %220 = vmatpush1.bf16.msra.mxu0 0
    %221 = vmatprep.subr.bf16.mxu0 0
    %222 = vmatpush1.bf16.msra.mxu0 0
    %223 = vmatprep.subr.bf16.mxu0 0
    %224 = vmatpush1.bf16.msra.mxu0 0
    %225 = vmatprep.subr.bf16.mxu0 0
    %226 = vmatpush1.bf16.msra.mxu0 0
    %227 = vmatprep.subr.bf16.mxu0 0
    %228 = vmatpush1.bf16.msra.mxu0 0
    %229 = vmatprep.subr.bf16.mxu0 0
    %230 = vmatpush1.bf16.msra.mxu0 0
    %231 = vmatprep.subr.bf16.mxu0 0
    %232 = vmatpush1.bf16.msra.mxu0 0
    %233 = vmatprep.subr.bf16.mxu0 0
    %234 = vmatpush1.bf16.msra.mxu0 0
    %235 = vmatprep.subr.bf16.mxu0 0
    %236 = vmatpush1.bf16.msra.mxu0 0
    %237 = vmatprep.mubr.bf16.mxu0 0
    %238 = vmatmul.mubr.bf16.gmra.mrb[0].mxu0 %v203
    %v239 = vpop.f32.mrb[0].mxu0
    %v240 = vadd.f32 %v188, %v239
    %v241 = vpop.f32.mrb[0].mxu0
    %v242 = vpop.f32.mrb[0].mxu0
    %v243 = vadd.f32 %v188, %v242
    %v244 = vpop.f32.mrb[0].mxu0
    %245 = vdwg.mxu0
    %v246 = vmax.f32 %v240, 0.0
    %v247 = vmax.f32 %v243, 0.0
    %v248 = vpack.c.bf16 %v247, %v246
    %v249 = vld [vmem:[#allocation11] sm:$0xf]
    %v250 = vld [vmem:[#allocation11 + $0x4] sm:$0xf]
    %v251 = vld [vmem:[#allocation11 + $0x8] sm:$0xf]
    %v252 = vld [vmem:[#allocation11 + $0xc] sm:$0xf]
    %v253 = vld [vmem:[#allocation11 + $0x10] sm:$0xf]
    %v254 = vld [vmem:[#allocation11 + $0x14] sm:$0xf]
    %v255 = vld [vmem:[#allocation11 + $0x18] sm:$0xf]
    %v256 = vld [vmem:[#allocation11 + $0x1c] sm:$0xf]
    %v265 = vunpack.c.l.b16 %v249
    %v266 = vunpack.c.l.b16 %v250
    %v267 = vunpack.c.l.b16 %v251
    %v268 = vunpack.c.l.b16 %v252
    %v269 = vunpack.c.l.b16 %v253
    %v270 = vunpack.c.l.b16 %v254
    %v271 = vunpack.c.l.b16 %v255
    %v272 = vunpack.c.l.b16 %v256
    %v273 = vpack.c.b16 %v266, %v265
    %v274 = vpack.c.b16 %v268, %v267
    %v275 = vpack.c.b16 %v270, %v269
    %v276 = vpack.c.b16 %v272, %v271
    %vm281 = vcmask 523264
    %v283 = vsel %vm281, %v248, 0
    %285 = vmatprep.subr.bf16.mxu0 0
    %286 = vmatpush1.bf16.msra.mxu0 %v273
    %287 = vmatprep.subr.bf16.mxu0 0
    %288 = vmatpush1.bf16.msra.mxu0 %v274
    %289 = vmatprep.subr.bf16.mxu0 0
    %290 = vmatpush1.bf16.msra.mxu0 %v275
    %291 = vmatprep.subr.bf16.mxu0 0
    %292 = vmatpush1.bf16.msra.mxu0 %v276
    %293 = vmatprep.subr.bf16.mxu0 0
    %294 = vmatpush1.bf16.msra.mxu0 0
    %295 = vmatprep.subr.bf16.mxu0 0
    %296 = vmatpush1.bf16.msra.mxu0 0
    %297 = vmatprep.subr.bf16.mxu0 0
    %298 = vmatpush1.bf16.msra.mxu0 0
    %299 = vmatprep.subr.bf16.mxu0 0
    %300 = vmatpush1.bf16.msra.mxu0 0
    %301 = vmatprep.subr.bf16.mxu0 0
    %302 = vmatpush1.bf16.msra.mxu0 0
    %303 = vmatprep.subr.bf16.mxu0 0
    %304 = vmatpush1.bf16.msra.mxu0 0
    %305 = vmatprep.subr.bf16.mxu0 0
    %306 = vmatpush1.bf16.msra.mxu0 0
    %307 = vmatprep.subr.bf16.mxu0 0
    %308 = vmatpush1.bf16.msra.mxu0 0
    %309 = vmatprep.subr.bf16.mxu0 0
    %310 = vmatpush1.bf16.msra.mxu0 0
    %311 = vmatprep.subr.bf16.mxu0 0
    %312 = vmatpush1.bf16.msra.mxu0 0
    %313 = vmatprep.subr.bf16.mxu0 0
    %314 = vmatpush1.bf16.msra.mxu0 0
    %315 = vmatprep.subr.bf16.mxu0 0
    %316 = vmatpush1.bf16.msra.mxu0 0
    %317 = vmatprep.mubr.bf16.mxu0 0
    %318 = vmatmul.mubr.bf16.gmra.mrb[0].mxu0 %v283
    %v319 = vpop.f32.mrb[0].mxu0
    %v320 = vadd.f32 0.0, %v319
    %v321 = vpop.f32.mrb[0].mxu0
    %v322 = vpop.f32.mrb[0].mxu0
    %v323 = vadd.f32 0.0, %v322
    %v324 = vpop.f32.mrb[0].mxu0
    %325 = vdwg.mxu0
    %v326 = vadd.f32 %v115, %v320
    %v327 = vadd.f32 %v116, %v323
    %v328 = vld [vmem:[#allocation13] sm:$0x1]
    %v330 = vlaneseq
    %v331 = vshrl.u32 %v330, 7
    %v332 = vsub.s32 0, %v331
    %v333 = vrot.slane %v328, %v332
    %v335 = vadd.f32 %v326, %v333
    %v336 = vadd.f32 %v327, %v333
    %337 = vst.msk [vmem:[#allocation14] sm:$0xff] %vm119, %v335
    %338 = vst.msk [vmem:[#allocation14 + $0x8] sm:$0xff] %vm119, %v336
    // Predicated region
    $region58: #{encoder_forward.9} parent=1 // pred_check
      _
    $region59: #{encoder_forward.9} parent=1 // pred_check_branch
      %340 = sbr.rel (0) target = $region61
    $region60: #{encoder_forward.9} parent=1 // pred_region
      %s342 = ssub.s32 256, 256
      %343 = vsyncadd [#allocation4], %s342
      %s344 = sshll.u32 [#allocation14], 4
      %s345 = int_to_ptr.vmem [resolvable:$true] %s344
      %350 = dma.vmem_to_hbm [thread:$0]  %s345, 256, %s7, [#allocation4], 128, 128, 8
    $region61: #{encoder_forward.9} parent=1 // pred_fallthru
      _
    // Predicated region
    $region62: #{encoder_forward.9} parent=1 // pred_check
      _
    $region63: #{encoder_forward.9} parent=1 // pred_check_branch
      %352 = sbr.rel (0) target = $region65
    $region64: #{encoder_forward.9} parent=1 // pred_region
      %353 = dma.done [#allocation4], 256
    $region65: #{encoder_forward.9} parent=1 // pred_fallthru
      _
    %354 = vsyncpa [#allocation3], 1
    %355 = vsyncpa [#allocation6], 1
    %356 = vsyncpa [#allocation9], 1
    %357 = vsyncpa [#allocation12], 1
    %358 = vsyncpa [#allocation4], 1

// kernel: encoder_forward.8
$region0: #{encoder_forward.8}
  #allocation0 [shape = 'u32[]', space=smem, size = 0x4, offset = 0x4, fixed_abs, tag = 'smem constant byte address 0x4 - core index']
  #allocation1 [shape = 'u32[144,128]{1,0:T(1,128)}', space=vmem, size = 0x12000, scoped, tag = 'internal scratch']
  %s0 = inlined_call_operand.hbm [shape: bf16[2,8,32], index: 0, kind: input, shape index: {}]
  %s1 = inlined_call_operand.hbm [shape: bf16[2,8,32], index: 1, kind: input, shape index: {}]
  %s2 = inlined_call_operand.hbm [shape: bf16[2,8,32], index: 2, kind: input, shape index: {}]
  %s3 = inlined_call_operand.hbm [shape: s8[2,1,8,8], index: 3, kind: input, shape index: {}]
  %s4 = inlined_call_operand.hbm [shape: bf16[32,32], index: 4, kind: input, shape index: {}]
  %s5 = inlined_call_operand.hbm [shape: f32[1,32], index: 5, kind: input, shape index: {}]
  %s6 = inlined_call_operand.hbm [shape: f32[2,8,32], index: 6, kind: input, shape index: {}, may-alias: {6,7}]
  %s7 = inlined_call_operand.hbm [shape: f32[2,8,32], index: 7, kind: output, shape index: {}, may-alias: {6,7}]
  %s8 = sld [smem:[#allocation0]]
  $region89: #{encoder_forward.8} parent=0
    _
  %s10 = ssub.s32 1, %s8
  %s11 = scalar_select 0, %s10, %s8
  $region1: #{encoder_forward.8} parent=0
    #allocation2 [shape = 'u8[4096]{0}', space=vmem, size = 0x1000, scoped, tag = 'input window, operand 0']
    #allocation3 [shape = 's32[2]{0}', space=sflag, size = 0x8, scoped, tag = 'scoped memory for encoder_forward.8']
    #allocation4 [shape = 's32[2]{0}', space=sflag, size = 0x8, scoped, tag = 'scoped memory for encoder_forward.8']
    #allocation5 [shape = 'u8[4096]{0}', space=vmem, size = 0x1000, scoped, tag = 'input window, operand 1']
    #allocation6 [shape = 's32[2]{0}', space=sflag, size = 0x8, scoped, tag = 'scoped memory for encoder_forward.8']
    #allocation7 [shape = 'u8[4096]{0}', space=vmem, size = 0x1000, scoped, tag = 'input window, operand 2']
    #allocation8 [shape = 'u8[2048]{0}', space=vmem, size = 0x800, scoped, tag = 'input window, operand 3']
    #allocation9 [shape = 's32[2]{0}', space=sflag, size = 0x8, scoped, tag = 'scoped memory for encoder_forward.8']
    #allocation10 [shape = 'u8[8192]{0}', space=vmem, size = 0x2000, scoped, tag = 'input window, operand 4, single buffered']
    #allocation11 [shape = 'u8[512]{0}', space=vmem, size = 0x400, scoped, tag = 'input window, operand 5, single buffered']
    #allocation12 [shape = 's32[1]{0}', space=sflag, size = 0x4, scoped, tag = 'scoped memory for encoder_forward.8']
    #allocation13 [shape = 'u8[8192]{0}', space=vmem, size = 0x2000, scoped, tag = 'input window, operand 6']
    #allocation14 [shape = 'u8[8192]{0}', space=vmem, size = 0x2000, scoped, tag = 'output window, operand 0']
    %12 = vsyncpa [#allocation3], 0
    %s13 = scalar_lea.sflag [#allocation3], 1
    %14 = vsyncpa %s13, 0
    %15 = vsyncpa [#allocation6], 0
    %s16 = scalar_lea.sflag [#allocation6], 1
    %17 = vsyncpa %s16, 0
    %18 = vsyncpa [#allocation9], 0
    %s19 = scalar_lea.sflag [#allocation9], 1
    %20 = vsyncpa %s19, 0
    %21 = vsyncpa [#allocation12], 0
    %22 = vsyncpa [#allocation4], 0
    %s23 = scalar_lea.sflag [#allocation4], 1
    %24 = vsyncpa %s23, 0
    loop: start=0, step=1, limit=4
    $region2: #{encoder_forward.8} parent=1 // loop_pre_header
      _
    $region3: #{encoder_forward.8} parent=1 // loop_header
      %s26 = sphi 0, %s30
      %p27 = scmp.ge.s32.totalorder %s26, 4
      %s33 = sphi 0, %s45
      %s34 = sphi 0, %s41
      %s35 = sphi 0, %s33
      %s36 = sphi 0, %s34
      %s37 = sphi 0, %s35
      %s38 = sphi 0, %s36
      %s50 = sphi 0, %s52
      %s53 = sphi 0, %s50
      %s54 = sphi 0, %s53
      %s70 = sphi 0, %s54
      %s76 = sphi 0, %s78
      %s79 = sphi 0, %s76
      %s80 = sphi 0, %s79
      %s96 = sphi 0, %s80
      %s102 = sphi 0, %s104
      %s105 = sphi 0, %s102
      %s106 = sphi 0, %s105
      %s122 = sphi 0, %s106
      %s130 = sphi 0, %s132
      %s133 = sphi 0, %s130
      %s134 = sphi 0, %s133
      %s150 = sphi 0, %s134
      %s154 = sphi 0, %s154
      %s156 = sphi 0, %s154
      %s157 = sphi 0, %s156
      %s171 = sphi 0, %s157
      %s175 = sphi 0, %s175
      %s177 = sphi 0, %s175
      %s178 = sphi 0, %s177
      %s192 = sphi 0, %s178
      %s200 = sphi 0, %s202
      %s203 = sphi 0, %s200
      %s204 = sphi 0, %s203
      %s220 = sphi 0, %s204
      %s228 = sphi 0, %s230
      %s231 = sphi 0, %s228
      %s232 = sphi 0, %s231
      %s248 = sphi 0, %s232
    $region4: #{encoder_forward.8} parent=1 // loop_header_branch
      %29 = sbr.rel (%p27) target = $region8
    $region5: #{encoder_forward.8} parent=1 // loop_body
      %s31 = ssub.s32 %s26, 1
      %s32 = ssub.s32 %s26, 2
      %s39 = sadd.s32 1, %s34
      %p40 = scmp.ge.s32.totalorder %s39, 1
      %s41 = scalar_select %p40, 0, %s39
      %s42 = sadd.s32 1, %s33
      %s43 = scalar_select %p40, %s42, %s33
      %p44 = scmp.ge.s32.totalorder %s43, 2
      %s45 = scalar_select %p44, 0, %s43
      %s46 = ssub.s32 %s33, %s45
      %s47 = ssub.s32 %s34, %s41
      %s48 = sor.u32 %s46, %s47
      %p49 = scmp.eq.s32.totalorder %s48, 0
      %s51 = sadd.s32 %s50, 1
      %s52 = scalar_select %p49, %s50, %s51
      %p55 = pneg %p49
      %p56 = scmp.eq.s32.totalorder %s26, 1
      %p57 = por %p55, %p56
      %p58 = scmp.ne.s32.totalorder %s50, %s53
      %p59 = scmp.eq.s32.totalorder %s26, 0
      %p60 = por %p58, %p59
      %p61 = scmp.ne.s32.totalorder %s50, %s53
      %p62 = scmp.eq.s32.totalorder %s31, 1
      %p63 = por %p61, %p62
      %p64 = scmp.ne.s32.totalorder %s53, %s54
      %p65 = scmp.eq.s32.totalorder %s31, 0
      %p66 = por %p64, %p65
      %p67 = scmp.ne.s32.totalorder %s53, %s54
      %p68 = scmp.eq.s32.totalorder %s32, 1
      %p69 = por %p67, %p68
      %p71 = scmp.ne.s32.totalorder %s54, %s70
      %p72 = scmp.eq.s32.totalorder %s32, 0
      %p73 = por %p71, %p72
      %s74 = ssub.s32 %s33, %s45
      %p75 = scmp.eq.s32.totalorder %s74, 0
      %s77 = sadd.s32 %s76, 1
      %s78 = scalar_select %p75, %s76, %s77
      %p81 = pneg %p75
      %p82 = scmp.eq.s32.totalorder %s26, 1
      %p83 = por %p81, %p82
      %p84 = scmp.ne.s32.totalorder %s76, %s79
      %p85 = scmp.eq.s32.totalorder %s26, 0
      %p86 = por %p84, %p85
      %p87 = scmp.ne.s32.totalorder %s76, %s79
      %p88 = scmp.eq.s32.totalorder %s31, 1
      %p89 = por %p87, %p88
      %p90 = scmp.ne.s32.totalorder %s79, %s80
      %p91 = scmp.eq.s32.totalorder %s31, 0
      %p92 = por %p90, %p91
      %p93 = scmp.ne.s32.totalorder %s79, %s80
      %p94 = scmp.eq.s32.totalorder %s32, 1
      %p95 = por %p93, %p94
      %p97 = scmp.ne.s32.totalorder %s80, %s96
      %p98 = scmp.eq.s32.totalorder %s32, 0
      %p99 = por %p97, %p98
      %s100 = ssub.s32 %s33, %s45
      %p101 = scmp.eq.s32.totalorder %s100, 0
      %s103 = sadd.s32 %s102, 1
      %s104 = scalar_select %p101, %s102, %s103
      %p107 = pneg %p101
      %p108 = scmp.eq.s32.totalorder %s26, 1
      %p109 = por %p107, %p108
      %p110 = scmp.ne.s32.totalorder %s102, %s105
      %p111 = scmp.eq.s32.totalorder %s26, 0
      %p112 = por %p110, %p111
      %p113 = scmp.ne.s32.totalorder %s102, %s105
      %p114 = scmp.eq.s32.totalorder %s31, 1
      %p115 = por %p113, %p114
      %p116 = scmp.ne.s32.totalorder %s105, %s106
      %p117 = scmp.eq.s32.totalorder %s31, 0
      %p118 = por %p116, %p117
      %p119 = scmp.ne.s32.totalorder %s105, %s106
      %p120 = scmp.eq.s32.totalorder %s32, 1
      %p121 = por %p119, %p120
      %p123 = scmp.ne.s32.totalorder %s106, %s122
      %p124 = scmp.eq.s32.totalorder %s32, 0
      %p125 = por %p123, %p124
      %s126 = ssub.s32 %s33, %s45
      %s127 = ssub.s32 %s34, %s41
      %s128 = sor.u32 %s126, %s127
      %p129 = scmp.eq.s32.totalorder %s128, 0
      %s131 = sadd.s32 %s130, 1
      %s132 = scalar_select %p129, %s130, %s131
      %p135 = pneg %p129
      %p136 = scmp.eq.s32.totalorder %s26, 1
      %p137 = por %p135, %p136
      %p138 = scmp.ne.s32.totalorder %s130, %s133
      %p139 = scmp.eq.s32.totalorder %s26, 0
      %p140 = por %p138, %p139
      %p141 = scmp.ne.s32.totalorder %s130, %s133
      %p142 = scmp.eq.s32.totalorder %s31, 1
      %p143 = por %p141, %p142
      %p144 = scmp.ne.s32.totalorder %s133, %s134
      %p145 = scmp.eq.s32.totalorder %s31, 0
      %p146 = por %p144, %p145
      %p147 = scmp.ne.s32.totalorder %s133, %s134
      %p148 = scmp.eq.s32.totalorder %s32, 1
      %p149 = por %p147, %p148
      %p151 = scmp.ne.s32.totalorder %s134, %s150
      %p152 = scmp.eq.s32.totalorder %s32, 0
      %p153 = por %p151, %p152
      %s155 = sadd.s32 %s154, 1
      %p158 = scmp.eq.s32.totalorder %s26, 1
      %p159 = scmp.ne.s32.totalorder %s154, %s156
      %p160 = scmp.eq.s32.totalorder %s26, 0
      %p161 = por %p159, %p160
      %p162 = scmp.ne.s32.totalorder %s154, %s156
      %p163 = scmp.eq.s32.totalorder %s31, 1
      %p164 = por %p162, %p163
      %p165 = scmp.ne.s32.totalorder %s156, %s157
      %p166 = scmp.eq.s32.totalorder %s31, 0
      %p167 = por %p165, %p166
      %p168 = scmp.ne.s32.totalorder %s156, %s157
      %p169 = scmp.eq.s32.totalorder %s32, 1
      %p170 = por %p168, %p169
      %p172 = scmp.ne.s32.totalorder %s157, %s171
      %p173 = scmp.eq.s32.totalorder %s32, 0
      %p174 = por %p172, %p173
      %s176 = sadd.s32 %s175, 1
      %p179 = scmp.eq.s32.totalorder %s26, 1
      %p180 = scmp.ne.s32.totalorder %s175, %s177
      %p181 = scmp.eq.s32.totalorder %s26, 0
      %p182 = por %p180, %p181
      %p183 = scmp.ne.s32.totalorder %s175, %s177
      %p184 = scmp.eq.s32.totalorder %s31, 1
      %p185 = por %p183, %p184
      %p186 = scmp.ne.s32.totalorder %s177, %s178
      %p187 = scmp.eq.s32.totalorder %s31, 0
      %p188 = por %p186, %p187
      %p189 = scmp.ne.s32.totalorder %s177, %s178
      %p190 = scmp.eq.s32.totalorder %s32, 1
      %p191 = por %p189, %p190
      %p193 = scmp.ne.s32.totalorder %s178, %s192
      %p194 = scmp.eq.s32.totalorder %s32, 0
      %p195 = por %p193, %p194
      %s196 = ssub.s32 %s33, %s45
      %s197 = ssub.s32 %s34, %s41
      %s198 = sor.u32 %s196, %s197
      %p199 = scmp.eq.s32.totalorder %s198, 0
      %s201 = sadd.s32 %s200, 1
      %s202 = scalar_select %p199, %s200, %s201
      %p205 = pneg %p199
      %p206 = scmp.eq.s32.totalorder %s26, 1
      %p207 = por %p205, %p206
      %p208 = scmp.ne.s32.totalorder %s200, %s203
      %p209 = scmp.eq.s32.totalorder %s26, 0
      %p210 = por %p208, %p209
      %p211 = scmp.ne.s32.totalorder %s200, %s203
      %p212 = scmp.eq.s32.totalorder %s31, 1
      %p213 = por %p211, %p212
      %p214 = scmp.ne.s32.totalorder %s203, %s204
      %p215 = scmp.eq.s32.totalorder %s31, 0
      %p216 = por %p214, %p215
      %p217 = scmp.ne.s32.totalorder %s203, %s204
      %p218 = scmp.eq.s32.totalorder %s32, 1
      %p219 = por %p217, %p218
      %p221 = scmp.ne.s32.totalorder %s204, %s220
      %p222 = scmp.eq.s32.totalorder %s32, 0
      %p223 = por %p221, %p222
      %s224 = ssub.s32 %s33, %s45
      %s225 = ssub.s32 %s34, %s41
      %s226 = sor.u32 %s224, %s225
      %p227 = scmp.eq.s32.totalorder %s226, 0
      %s229 = sadd.s32 %s228, 1
      %s230 = scalar_select %p227, %s228, %s229
      %p233 = pneg %p227
      %p234 = scmp.eq.s32.totalorder %s26, 1
      %p235 = por %p233, %p234
      %p236 = scmp.ne.s32.totalorder %s228, %s231
      %p237 = scmp.eq.s32.totalorder %s26, 0
      %p238 = por %p236, %p237
      %p239 = scmp.ne.s32.totalorder %s228, %s231
      %p240 = scmp.eq.s32.totalorder %s31, 1
      %p241 = por %p239, %p240
      %p242 = scmp.ne.s32.totalorder %s231, %s232
      %p243 = scmp.eq.s32.totalorder %s31, 0
      %p244 = por %p242, %p243
      %p245 = scmp.ne.s32.totalorder %s231, %s232
      %p246 = scmp.eq.s32.totalorder %s32, 1
      %p247 = por %p245, %p246
      %p249 = scmp.ne.s32.totalorder %s232, %s248
      %p250 = scmp.eq.s32.totalorder %s32, 0
      %p251 = por %p249, %p250
      %p252 = scmp.le.s32.totalorder 1, %s26
      %p253 = scmp.lt.s32.totalorder %s26, 3
      %p254 = pnand %p252, %p253
      %p255 = pneg %p254
      // Predicated region
      $region9: #{encoder_forward.8} parent=5 // pred_check
        _
      $region10: #{encoder_forward.8} parent=5 // pred_check_branch
        %257 = sbr.rel (%p254) target = $region12
      $region11: #{encoder_forward.8} parent=5 // pred_region
        %s258 = ssub.s32 %s26, 1
        // Predicated region
        $region13: #{encoder_forward.8} parent=11 // pred_check
          %p259 = pneg %p167
        $region14: #{encoder_forward.8} parent=11 // pred_check_branch
          %261 = sbr.rel (%p259) target = $region16
        $region15: #{encoder_forward.8} parent=11 // pred_region
          %s263 = ssub.s32 256, 256
          %264 = vsyncadd [#allocation9], %s263
          %s265 = sshll.u32 [#allocation10], 4
          %s266 = int_to_ptr.vmem [resolvable:$true] %s265
          %271 = dma.hbm_to_vmem [thread:$0]  %s4, 256, %s266, [#allocation9], 64, 64, 4
        $region16: #{encoder_forward.8} parent=11 // pred_fallthru
          _
        // Predicated region
        $region17: #{encoder_forward.8} parent=11 // pred_check
          %p272 = pneg %p188
        $region18: #{encoder_forward.8} parent=11 // pred_check_branch
          %274 = sbr.rel (%p272) target = $region20
        $region19: #{encoder_forward.8} parent=11 // pred_region
          %s276 = ssub.s32 16, 16
          %277 = vsyncadd [#allocation12], %s276
          %s279 = sshll.u32 [#allocation11], 4
          %s280 = int_to_ptr.vmem [resolvable:$true] %s279
          %282 = dma.hbm_to_vmem [thread:$0]  %s5, 16, %s280, [#allocation12]
        $region20: #{encoder_forward.8} parent=11 // pred_fallthru
          _
      $region12: #{encoder_forward.8} parent=5 // pred_fallthru
        _
      %p283 = scmp.lt.s32.totalorder %s26, 2
      // Predicated region
      $region21: #{encoder_forward.8} parent=5 // pred_check
        %p284 = pneg %p283
      $region22: #{encoder_forward.8} parent=5 // pred_check_branch
        %286 = sbr.rel (%p284) target = $region24
      $region23: #{encoder_forward.8} parent=5 // pred_region
        // Predicated region
        $region25: #{encoder_forward.8} parent=23 // pred_check
          %p287 = pneg %p60
        $region26: #{encoder_forward.8} parent=23 // pred_check_branch
          %289 = sbr.rel (%p287) target = $region28
        $region27: #{encoder_forward.8} parent=23 // pred_region
          %s290 = sand.u32 %s26, 1
          %s291 = scalar_lea.sflag [#allocation3], %s290
          %s292 = sand.u32 %s50, 1
          %s293 = smul.addr %s292, 4
          %s294 = scalar_lea.vmem [#allocation2], %s293
          %s296 = ssub.s32 64, 64
          %297 = vsyncadd %s291, %s296
          %s298 = sadd.s32 %s34, %s33
          %s299 = smul.addr %s298, 64
          %s300 = scalar_lea.hbm %s0, %s299
          %s302 = sshll.u32 %s294, 4
          %s303 = int_to_ptr.vmem [resolvable:$true] %s302
          %305 = dma.hbm_to_vmem [thread:$0]  %s300, 64, %s303, %s291
        $region28: #{encoder_forward.8} parent=23 // pred_fallthru
          _
        // Predicated region
        $region29: #{encoder_forward.8} parent=23 // pred_check
          %p306 = pneg %p86
        $region30: #{encoder_forward.8} parent=23 // pred_check_branch
          %308 = sbr.rel (%p306) target = $region32
        $region31: #{encoder_forward.8} parent=23 // pred_region
          %s309 = sand.u32 %s26, 1
          %s310 = scalar_lea.sflag [#allocation6], %s309
          %s311 = sand.u32 %s76, 1
          %s312 = smul.addr %s311, 4
          %s313 = scalar_lea.vmem [#allocation5], %s312
          %s315 = ssub.s32 64, 64
          %316 = vsyncadd %s310, %s315
          %s317 = smul.addr %s33, 64
          %s318 = scalar_lea.hbm %s1, %s317
          %s320 = sshll.u32 %s313, 4
          %s321 = int_to_ptr.vmem [resolvable:$true] %s320
          %323 = dma.hbm_to_vmem [thread:$0]  %s318, 64, %s321, %s310
        $region32: #{encoder_forward.8} parent=23 // pred_fallthru
          _
        // Predicated region
        $region33: #{encoder_forward.8} parent=23 // pred_check
          %p324 = pneg %p112
        $region34: #{encoder_forward.8} parent=23 // pred_check_branch
          %326 = sbr.rel (%p324) target = $region36
        $region35: #{encoder_forward.8} parent=23 // pred_region
          %s327 = sand.u32 %s26, 1
          %s328 = scalar_lea.sflag [#allocation6], %s327
          %s329 = sand.u32 %s102, 1
          %s330 = smul.addr %s329, 4
          %s331 = scalar_lea.vmem [#allocation7], %s330
          %s333 = ssub.s32 64, 64
          %334 = vsyncadd %s328, %s333
          %s335 = smul.addr %s33, 64
          %s336 = scalar_lea.hbm %s2, %s335
          %s338 = sshll.u32 %s331, 4
          %s339 = int_to_ptr.vmem [resolvable:$true] %s338
          %341 = dma.hbm_to_vmem [thread:$0]  %s336, 64, %s339, %s328
        $region36: #{encoder_forward.8} parent=23 // pred_fallthru
          _
        // Predicated region
        $region37: #{encoder_forward.8} parent=23 // pred_check
          %p342 = pneg %p140
        $region38: #{encoder_forward.8} parent=23 // pred_check_branch
          %344 = sbr.rel (%p342) target = $region40
        $region39: #{encoder_forward.8} parent=23 // pred_region
          %s345 = sand.u32 %s26, 1
          %s346 = scalar_lea.sflag [#allocation9], %s345
          %s347 = sand.u32 %s130, 1
          %s348 = smul.addr %s347, 2
          %s349 = scalar_lea.vmem [#allocation8], %s348
          %s351 = ssub.s32 32, 32
          %352 = vsyncadd %s346, %s351
          %s353 = sadd.s32 %s34, %s33
          %s354 = smul.addr %s353, 32
          %s355 = scalar_lea.hbm %s3, %s354
          %s357 = sshll.u32 %s349, 4
          %s358 = int_to_ptr.vmem [resolvable:$true] %s357
          %360 = dma.hbm_to_vmem [thread:$0]  %s355, 32, %s358, %s346
        $region40: #{encoder_forward.8} parent=23 // pred_fallthru
          _
        // Predicated region
        $region41: #{encoder_forward.8} parent=23 // pred_check
          %p361 = pneg %p210
        $region42: #{encoder_forward.8} parent=23 // pred_check_branch
          %363 = sbr.rel (%p361) target = $region44
        $region43: #{encoder_forward.8} parent=23 // pred_region
          %s364 = sand.u32 %s26, 1
          %s365 = scalar_lea.sflag [#allocation3], %s364
          %s366 = sand.u32 %s200, 1
          %s367 = smul.addr %s366, 8
          %s368 = scalar_lea.vmem [#allocation13], %s367
          %s370 = ssub.s32 128, 128
          %371 = vsyncadd %s365, %s370
          %s372 = sadd.s32 %s34, %s33
          %s373 = smul.addr %s372, 128
          %s374 = scalar_lea.hbm %s6, %s373
          %s376 = sshll.u32 %s368, 4
          %s377 = int_to_ptr.vmem [resolvable:$true] %s376
          %379 = dma.hbm_to_vmem [thread:$0]  %s374, 128, %s377, %s365
        $region44: #{encoder_forward.8} parent=23 // pred_fallthru
          _
      $region24: #{encoder_forward.8} parent=5 // pred_fallthru
        _
      %p380 = scmp.le.s32.totalorder 1, %s26
      %p381 = scmp.lt.s32.totalorder %s26, 3
      %p382 = pnand %p380, %p381
      %p383 = pneg %p382
      // Predicated region
      $region45: #{encoder_forward.8} parent=5 // pred_check
        _
      $region46: #{encoder_forward.8} parent=5 // pred_check_branch
        %385 = sbr.rel (%p382) target = $region48
      $region47: #{encoder_forward.8} parent=5 // pred_region
        %s386 = ssub.s32 %s26, 1
        %s387 = sand.u32 %s31, 1
        %s388 = scalar_lea.sflag [#allocation3], %s387
        %s389 = sand.u32 %s53, 1
        %s390 = smul.addr %s389, 4
        %s391 = scalar_lea.vmem [#allocation2], %s390
        // Predicated region
        $region49: #{encoder_forward.8} parent=47 // pred_check
          %p392 = pneg %p66
        $region50: #{encoder_forward.8} parent=47 // pred_check_branch
          %394 = sbr.rel (%p392) target = $region52
        $region51: #{encoder_forward.8} parent=47 // pred_region
          %395 = dma.done %s388, 64
        $region52: #{encoder_forward.8} parent=47 // pred_fallthru
          _
        %s396 = sand.u32 %s31, 1
        %s397 = scalar_lea.sflag [#allocation6], %s396
        %s398 = sand.u32 %s79, 1
        %s399 = smul.addr %s398, 4
        %s400 = scalar_lea.vmem [#allocation5], %s399
        // Predicated region
        $region53: #{encoder_forward.8} parent=47 // pred_check
          %p401 = pneg %p92
        $region54: #{encoder_forward.8} parent=47 // pred_check_branch
          %403 = sbr.rel (%p401) target = $region56
        $region55: #{encoder_forward.8} parent=47 // pred_region
          %404 = dma.done %s397, 64
        $region56: #{encoder_forward.8} parent=47 // pred_fallthru
          _
        %s405 = sand.u32 %s31, 1
        %s406 = scalar_lea.sflag [#allocation6], %s405
        %s407 = sand.u32 %s105, 1
        %s408 = smul.addr %s407, 4
        %s409 = scalar_lea.vmem [#allocation7], %s408
        // Predicated region
        $region57: #{encoder_forward.8} parent=47 // pred_check
          %p410 = pneg %p118
        $region58: #{encoder_forward.8} parent=47 // pred_check_branch
          %412 = sbr.rel (%p410) target = $region60
        $region59: #{encoder_forward.8} parent=47 // pred_region
          %413 = dma.done %s406, 64
        $region60: #{encoder_forward.8} parent=47 // pred_fallthru
          _
        %s414 = sand.u32 %s31, 1
        %s415 = scalar_lea.sflag [#allocation9], %s414
        %s416 = sand.u32 %s133, 1
        %s417 = smul.addr %s416, 2
        %s418 = scalar_lea.vmem [#allocation8], %s417
        // Predicated region
        $region61: #{encoder_forward.8} parent=47 // pred_check
          %p419 = pneg %p146
        $region62: #{encoder_forward.8} parent=47 // pred_check_branch
          %421 = sbr.rel (%p419) target = $region64
        $region63: #{encoder_forward.8} parent=47 // pred_region
          %422 = dma.done %s415, 32
        $region64: #{encoder_forward.8} parent=47 // pred_fallthru
          _
        // Predicated region
        $region65: #{encoder_forward.8} parent=47 // pred_check
          %p423 = pneg %p167
        $region66: #{encoder_forward.8} parent=47 // pred_check_branch
          %425 = sbr.rel (%p423) target = $region68
        $region67: #{encoder_forward.8} parent=47 // pred_region
          %426 = dma.done [#allocation9], 256
        $region68: #{encoder_forward.8} parent=47 // pred_fallthru
          _
        // Predicated region
        $region69: #{encoder_forward.8} parent=47 // pred_check
          %p427 = pneg %p188
        $region70: #{encoder_forward.8} parent=47 // pred_check_branch
          %429 = sbr.rel (%p427) target = $region72
        $region71: #{encoder_forward.8} parent=47 // pred_region
          %430 = dma.done [#allocation12], 16
        $region72: #{encoder_forward.8} parent=47 // pred_fallthru
          _
        %s431 = sand.u32 %s31, 1
        %s432 = scalar_lea.sflag [#allocation3], %s431
        %s433 = sand.u32 %s203, 1
        %s434 = smul.addr %s433, 8
        %s435 = scalar_lea.vmem [#allocation13], %s434
        // Predicated region
        $region73: #{encoder_forward.8} parent=47 // pred_check
          %p436 = pneg %p216
        $region74: #{encoder_forward.8} parent=47 // pred_check_branch
          %438 = sbr.rel (%p436) target = $region76
        $region75: #{encoder_forward.8} parent=47 // pred_region
          %439 = dma.done %s432, 128
        $region76: #{encoder_forward.8} parent=47 // pred_fallthru
          _
        %s440 = sand.u32 %s31, 1
        %s441 = scalar_lea.sflag [#allocation3], %s440
        %s442 = sand.u32 %s53, 1
        %s443 = smul.addr %s442, 4
        %s444 = scalar_lea.vmem [#allocation2], %s443
        %p445 = pneg %p66
        %p446 = pneg %p63
        %s447 = sand.u32 %s31, 1
        %s448 = scalar_lea.sflag [#allocation6], %s447
        %s449 = sand.u32 %s79, 1
        %s450 = smul.addr %s449, 4
        %s451 = scalar_lea.vmem [#allocation5], %s450
        %p452 = pneg %p92
        %p453 = pneg %p89
        %s454 = sand.u32 %s31, 1
        %s455 = scalar_lea.sflag [#allocation6], %s454
        %s456 = sand.u32 %s105, 1
        %s457 = smul.addr %s456, 4
        %s458 = scalar_lea.vmem [#allocation7], %s457
        %p459 = pneg %p118
        %p460 = pneg %p115
        %s461 = sand.u32 %s31, 1
        %s462 = scalar_lea.sflag [#allocation9], %s461
        %s463 = sand.u32 %s133, 1
        %s464 = smul.addr %s463, 2
        %s465 = scalar_lea.vmem [#allocation8], %s464
        %p466 = pneg %p146
        %p467 = pneg %p143
        %p468 = pneg %p167
        %p469 = pneg %p164
        %p470 = pneg %p188
        %p471 = pneg %p185
        %s472 = sand.u32 %s31, 1
        %s473 = scalar_lea.sflag [#allocation3], %s472
        %s474 = sand.u32 %s203, 1
        %s475 = smul.addr %s474, 8
        %s476 = scalar_lea.vmem [#allocation13], %s475
        %p477 = pneg %p216
        %p478 = pneg %p213
        %p479 = pneg %p244
        %p480 = pneg %p241
        %s481 = sand.u32 %s231, 1
        %s482 = scalar_lea.sflag [#allocation4], %s481
        %s483 = sand.u32 %s231, 1
        %s484 = smul.addr %s483, 8
        %s485 = scalar_lea.vmem [#allocation14], %s484
        %v489 = vld [vmem:[%s391] sm:$0xf]
        %v490 = vld [vmem:[%s400] sm:$0xf]
        %v491 = vld [vmem:[%s409] sm:$0xf]
        %v492 = vld [vmem:[%s418] sm:$0x3]
        %vm493 = vnez %v492
        %vm494 = vcmask 64512
        %v496 = vsel %vm494, %v489, 0
        %v499 = vsel %vm494, %v490, 0
        %501 = vmatprep.subr.bf16.mxu0 0
        %502 = vmatpush1.bf16.xpose.msra.mxu0 %v499
        %503 = vmatprep.subr.bf16.mxu0 0
        %504 = vmatpush1.bf16.xpose.msra.mxu0 0
        %505 = vmatprep.subr.bf16.mxu0 0
        %506 = vmatpush1.bf16.xpose.msra.mxu0 0
        %507 = vmatprep.subr.bf16.mxu0 0
        %508 = vmatpush1.bf16.xpose.msra.mxu0 0
        %509 = vmatprep.subr.bf16.mxu0 0
        %510 = vmatpush1.bf16.xpose.msra.mxu0 0
        %511 = vmatprep.subr.bf16.mxu0 0
        %512 = vmatpush1.bf16.xpose.msra.mxu0 0
        %513 = vmatprep.subr.bf16.mxu0 0
        %514 = vmatpush1.bf16.xpose.msra.mxu0 0
        %515 = vmatprep.subr.bf16.mxu0 0
        %516 = vmatpush1.bf16.xpose.msra.mxu0 0
        %517 = vmatprep.subr.bf16.mxu0 0
        %518 = vmatpush1.bf16.xpose.msra.mxu0 0
        %519 = vmatprep.subr.bf16.mxu0 0
        %520 = vmatpush1.bf16.xpose.msra.mxu0 0
        %521 = vmatprep.subr.bf16.mxu0 0
        %522 = vmatpush1.bf16.xpose.msra.mxu0 0
        %523 = vmatprep.subr.bf16.mxu0 0
        %524 = vmatpush1.bf16.xpose.msra.mxu0 0
        %525 = vmatprep.subr.bf16.mxu0 0
        %526 = vmatpush1.bf16.xpose.msra.mxu0 0
        %527 = vmatprep.subr.bf16.mxu0 0
        %528 = vmatpush1.bf16.xpose.msra.mxu0 0
        %529 = vmatprep.subr.bf16.mxu0 0
        %530 = vmatpush1.bf16.xpose.msra.mxu0 0
        %531 = vmatprep.subr.bf16.mxu0 0
        %532 = vmatpush1.bf16.xpose.msra.mxu0 0
        %533 = vmatprep.mubr.bf16.mxu0 0
        %534 = vmatmul.mubr.bf16.gmra.mrb[0].mxu0 %v496
        %v535 = vpop.f32.mrb[0].mxu0
        %v536 = vadd.f32 0.0, %v535
        %v537 = vpop.f32.mrb[0].mxu0
        %v538 = vpop.f32.mrb[0].mxu0
        %v539 = vpop.f32.mrb[0].mxu0
        %540 = vdwg.mxu0
        %v541 = vsel %vm493, 16843009, 0
        %v542 = vunpack.c.0.s8 %v541
        %vm543 = vcmp.ne.s32.totalorder %v542, 0
        %v544 = vsel %vm543, %v536, -1e+09
        %v545 = vsel %vm494, %v544, -inf
        %546 = vmax.xlane.f32.xlu0 %v545
        %v547 = vpop.xlane.xlu0 %546
        %v548 = vsub.f32 %v544, %v547
        %v549 = vmul.f32 %v548, 1.442695
        %v550 = vpow.pop %v549
        %v551 = vsel %vm494, %v550, 0.0
        %552 = vadd.xlane.f32.xlu0 %v551
        %v553 = vpop.xlane.xlu0 %552
        %v554 = vrcp.pop %v553
        %v555 = vpack.c.bf16 %v550, %v550
        %v557 = vsel %vm494, %v555, 0
        %vm559 = vcmask 1043456
        %v561 = vsel %vm559, %v491, 0
        %563 = vmatprep.subr.bf16.mxu0 0
        %564 = vmatpush1.bf16.msra.mxu0 %v561
        %565 = vmatprep.subr.bf16.mxu0 0
        %566 = vmatpush1.bf16.msra.mxu0 0
        %567 = vmatprep.subr.bf16.mxu0 0
        %568 = vmatpush1.bf16.msra.mxu0 0
        %569 = vmatprep.subr.bf16.mxu0 0
        %570 = vmatpush1.bf16.msra.mxu0 0
        %571 = vmatprep.subr.bf16.mxu0 0
        %572 = vmatpush1.bf16.msra.mxu0 0
        %573 = vmatprep.subr.bf16.mxu0 0
        %574 = vmatpush1.bf16.msra.mxu0 0
        %575 = vmatprep.subr.bf16.mxu0 0
        %576 = vmatpush1.bf16.msra.mxu0 0
        %577 = vmatprep.subr.bf16.mxu0 0
        %578 = vmatpush1.bf16.msra.mxu0 0
        %579 = vmatprep.subr.bf16.mxu0 0
        %580 = vmatpush1.bf16.msra.mxu0 0
        %581 = vmatprep.subr.bf16.mxu0 0
        %582 = vmatpush1.bf16.msra.mxu0 0
        %583 = vmatprep.subr.bf16.mxu0 0
        %584 = vmatpush1.bf16.msra.mxu0 0
        %585 = vmatprep.subr.bf16.mxu0 0
        %586 = vmatpush1.bf16.msra.mxu0 0
        %587 = vmatprep.subr.bf16.mxu0 0
        %588 = vmatpush1.bf16.msra.mxu0 0
        %589 = vmatprep.subr.bf16.mxu0 0
        %590 = vmatpush1.bf16.msra.mxu0 0
        %591 = vmatprep.subr.bf16.mxu0 0
        %592 = vmatpush1.bf16.msra.mxu0 0
        %593 = vmatprep.subr.bf16.mxu0 0
        %594 = vmatpush1.bf16.msra.mxu0 0
        %595 = vmatprep.mubr.bf16.mxu0 0
        %596 = vmatmul.mubr.bf16.gmra.mrb[0].mxu0 %v557
        %v597 = vpop.f32.mrb[0].mxu0
        %v598 = vadd.f32 0.0, %v597
        %v599 = vpop.f32.mrb[0].mxu0
        %v600 = vpop.f32.mrb[0].mxu0
        %v601 = vpop.f32.mrb[0].mxu0
        %602 = vdwg.mxu0
        %v603 = vmul.f32 %v598, %v554
        %v604 = vpack.c.bf16 %v603, %v603
        %v606 = vunpack.c.l.b16 %v489
        %v607 = vpack.c.b16 %v606, %v606
        %608 = vrot.lane.b32.xlu0 %v607, 120
        %v609 = vpop.permute.xlu0 %608
        %v611 = vunpack.c.l.b16 %v490
        %v612 = vpack.c.b16 %v611, %v611
        %613 = vrot.lane.b32.xlu0 %v612, 120
        %v614 = vpop.permute.xlu0 %613
        %v616 = vsel %vm494, %v609, 0
        %v619 = vsel %vm494, %v614, 0
        %621 = vmatprep.subr.bf16.mxu0 0
        %622 = vmatpush1.bf16.xpose.msra.mxu0 %v619
        %623 = vmatprep.subr.bf16.mxu0 0
        %624 = vmatpush1.bf16.xpose.msra.mxu0 0
        %625 = vmatprep.subr.bf16.mxu0 0
        %626 = vmatpush1.bf16.xpose.msra.mxu0 0
        %627 = vmatprep.subr.bf16.mxu0 0
        %628 = vmatpush1.bf16.xpose.msra.mxu0 0
        %629 = vmatprep.subr.bf16.mxu0 0
        %630 = vmatpush1.bf16.xpose.msra.mxu0 0
        %631 = vmatprep.subr.bf16.mxu0 0
        %632 = vmatpush1.bf16.xpose.msra.mxu0 0
        %633 = vmatprep.subr.bf16.mxu0 0
        %634 = vmatpush1.bf16.xpose.msra.mxu0 0
        %635 = vmatprep.subr.bf16.mxu0 0
        %636 = vmatpush1.bf16.xpose.msra.mxu0 0
        %637 = vmatprep.subr.bf16.mxu0 0
        %638 = vmatpush1.bf16.xpose.msra.mxu0 0
        %639 = vmatprep.subr.bf16.mxu0 0
        %640 = vmatpush1.bf16.xpose.msra.mxu0 0
        %641 = vmatprep.subr.bf16.mxu0 0
        %642 = vmatpush1.bf16.xpose.msra.mxu0 0
        %643 = vmatprep.subr.bf16.mxu0 0
        %644 = vmatpush1.bf16.xpose.msra.mxu0 0
        %645 = vmatprep.subr.bf16.mxu0 0
        %646 = vmatpush1.bf16.xpose.msra.mxu0 0
        %647 = vmatprep.subr.bf16.mxu0 0
        %648 = vmatpush1.bf16.xpose.msra.mxu0 0
        %649 = vmatprep.subr.bf16.mxu0 0
        %650 = vmatpush1.bf16.xpose.msra.mxu0 0
        %651 = vmatprep.subr.bf16.mxu0 0
        %652 = vmatpush1.bf16.xpose.msra.mxu0 0
        %653 = vmatprep.mubr.bf16.mxu0 0
        %654 = vmatmul.mubr.bf16.gmra.mrb[0].mxu0 %v616
        %v655 = vpop.f32.mrb[0].mxu0
        %v656 = vadd.f32 0.0, %v655
        %v657 = vpop.f32.mrb[0].mxu0
        %v658 = vpop.f32.mrb[0].mxu0
        %v659 = vpop.f32.mrb[0].mxu0
        %660 = vdwg.mxu0
        %v661 = vsel %vm543, %v656, -1e+09
        %v662 = vsel %vm494, %v661, -inf
        %663 = vmax.xlane.f32.xlu0 %v662
        %v664 = vpop.xlane.xlu0 %663
        %v665 = vsub.f32 %v661, %v664
        %v666 = vmul.f32 %v665, 1.442695
        %v667 = vpow.pop %v666
        %v668 = vsel %vm494, %v667, 0.0
        %669 = vadd.xlane.f32.xlu0 %v668
        %v670 = vpop.xlane.xlu0 %669
        %v671 = vrcp.pop %v670
        %v672 = vpack.c.bf16 %v667, %v667
        %v674 = vunpack.c.l.b16 %v491
        %v675 = vpack.c.b16 %v674, %v674
        %676 = vrot.lane.b32.xlu0 %v675, 120
        %v677 = vpop.permute.xlu0 %676
        %v679 = vsel %vm494, %v672, 0
        %v682 = vsel %vm559, %v677, 0
        %684 = vmatprep.subr.bf16.mxu0 0
        %685 = vmatpush1.bf16.msra.mxu0 %v682
        %686 = vmatprep.subr.bf16.mxu0 0
        %687 = vmatpush1.bf16.msra.mxu0 0
        %688 = vmatprep.subr.bf16.mxu0 0
        %689 = vmatpush1.bf16.msra.mxu0 0
        %690 = vmatprep.subr.bf16.mxu0 0
        %691 = vmatpush1.bf16.msra.mxu0 0
        %692 = vmatprep.subr.bf16.mxu0 0
        %693 = vmatpush1.bf16.msra.mxu0 0
        %694 = vmatprep.subr.bf16.mxu0 0
        %695 = vmatpush1.bf16.msra.mxu0 0
        %696 = vmatprep.subr.bf16.mxu0 0
        %697 = vmatpush1.bf16.msra.mxu0 0
        %698 = vmatprep.subr.bf16.mxu0 0
        %699 = vmatpush1.bf16.msra.mxu0 0
        %700 = vmatprep.subr.bf16.mxu0 0
        %701 = vmatpush1.bf16.msra.mxu0 0
        %702 = vmatprep.subr.bf16.mxu0 0
        %703 = vmatpush1.bf16.msra.mxu0 0
        %704 = vmatprep.subr.bf16.mxu0 0
        %705 = vmatpush1.bf16.msra.mxu0 0
        %706 = vmatprep.subr.bf16.mxu0 0
        %707 = vmatpush1.bf16.msra.mxu0 0
        %708 = vmatprep.subr.bf16.mxu0 0
        %709 = vmatpush1.bf16.msra.mxu0 0
        %710 = vmatprep.subr.bf16.mxu0 0
        %711 = vmatpush1.bf16.msra.mxu0 0
        %712 = vmatprep.subr.bf16.mxu0 0
        %713 = vmatpush1.bf16.msra.mxu0 0
        %714 = vmatprep.subr.bf16.mxu0 0
        %715 = vmatpush1.bf16.msra.mxu0 0
        %716 = vmatprep.mubr.bf16.mxu0 0
        %717 = vmatmul.mubr.bf16.gmra.mrb[0].mxu0 %v679
        %v718 = vpop.f32.mrb[0].mxu0
        %v719 = vadd.f32 0.0, %v718
        %v720 = vpop.f32.mrb[0].mxu0
        %v721 = vpop.f32.mrb[0].mxu0
        %v722 = vpop.f32.mrb[0].mxu0
        %723 = vdwg.mxu0
        %v724 = vmul.f32 %v719, %v671
        %v725 = vpack.c.bf16 %v724, %v724
        %726 = vrot.lane.b32.xlu0 %v607, 112
        %v727 = vpop.permute.xlu0 %726
        %728 = vrot.lane.b32.xlu0 %v612, 112
        %v729 = vpop.permute.xlu0 %728
        %v731 = vsel %vm494, %v727, 0
        %v734 = vsel %vm494, %v729, 0
        %736 = vmatprep.subr.bf16.mxu0 0
        %737 = vmatpush1.bf16.xpose.msra.mxu0 %v734
        %738 = vmatprep.subr.bf16.mxu0 0
        %739 = vmatpush1.bf16.xpose.msra.mxu0 0
        %740 = vmatprep.subr.bf16.mxu0 0
        %741 = vmatpush1.bf16.xpose.msra.mxu0 0
        %742 = vmatprep.subr.bf16.mxu0 0
        %743 = vmatpush1.bf16.xpose.msra.mxu0 0
        %744 = vmatprep.subr.bf16.mxu0 0
        %745 = vmatpush1.bf16.xpose.msra.mxu0 0
        %746 = vmatprep.subr.bf16.mxu0 0
        %747 = vmatpush1.bf16.xpose.msra.mxu0 0
        %748 = vmatprep.subr.bf16.mxu0 0
        %749 = vmatpush1.bf16.xpose.msra.mxu0 0
        %750 = vmatprep.subr.bf16.mxu0 0
        %751 = vmatpush1.bf16.xpose.msra.mxu0 0
        %752 = vmatprep.subr.bf16.mxu0 0
        %753 = vmatpush1.bf16.xpose.msra.mxu0 0
        %754 = vmatprep.subr.bf16.mxu0 0
        %755 = vmatpush1.bf16.xpose.msra.mxu0 0
        %756 = vmatprep.subr.bf16.mxu0 0
        %757 = vmatpush1.bf16.xpose.msra.mxu0 0
        %758 = vmatprep.subr.bf16.mxu0 0
        %759 = vmatpush1.bf16.xpose.msra.mxu0 0
        %760 = vmatprep.subr.bf16.mxu0 0
        %761 = vmatpush1.bf16.xpose.msra.mxu0 0
        %762 = vmatprep.subr.bf16.mxu0 0
        %763 = vmatpush1.bf16.xpose.msra.mxu0 0
        %764 = vmatprep.subr.bf16.mxu0 0
        %765 = vmatpush1.bf16.xpose.msra.mxu0 0
        %766 = vmatprep.subr.bf16.mxu0 0
        %767 = vmatpush1.bf16.xpose.msra.mxu0 0
        %768 = vmatprep.mubr.bf16.mxu0 0
        %769 = vmatmul.mubr.bf16.gmra.mrb[0].mxu0 %v731
        %v770 = vpop.f32.mrb[0].mxu0
        %v771 = vadd.f32 0.0, %v770
        %v772 = vpop.f32.mrb[0].mxu0
        %v773 = vpop.f32.mrb[0].mxu0
        %v774 = vpop.f32.mrb[0].mxu0
        %775 = vdwg.mxu0
        %v776 = vsel %vm543, %v771, -1e+09
        %v777 = vsel %vm494, %v776, -inf
        %778 = vmax.xlane.f32.xlu0 %v777
        %v779 = vpop.xlane.xlu0 %778
        %v780 = vsub.f32 %v776, %v779
        %v781 = vmul.f32 %v780, 1.442695
        %v782 = vpow.pop %v781
        %v783 = vsel %vm494, %v782, 0.0
        %784 = vadd.xlane.f32.xlu0 %v783
        %v785 = vpop.xlane.xlu0 %784
        %v786 = vrcp.pop %v785
        %v787 = vpack.c.bf16 %v782, %v782
        %788 = vrot.lane.b32.xlu0 %v675, 112
        %v789 = vpop.permute.xlu0 %788
        %v791 = vsel %vm494, %v787, 0
        %v794 = vsel %vm559, %v789, 0
        %796 = vmatprep.subr.bf16.mxu0 0
        %797 = vmatpush1.bf16.msra.mxu0 %v794
        %798 = vmatprep.subr.bf16.mxu0 0
        %799 = vmatpush1.bf16.msra.mxu0 0
        %800 = vmatprep.subr.bf16.mxu0 0
        %801 = vmatpush1.bf16.msra.mxu0 0
        %802 = vmatprep.subr.bf16.mxu0 0
        %803 = vmatpush1.bf16.msra.mxu0 0
        %804 = vmatprep.subr.bf16.mxu0 0
        %805 = vmatpush1.bf16.msra.mxu0 0
        %806 = vmatprep.subr.bf16.mxu0 0
        %807 = vmatpush1.bf16.msra.mxu0 0
        %808 = vmatprep.subr.bf16.mxu0 0
        %809 = vmatpush1.bf16.msra.mxu0 0
        %810 = vmatprep.subr.bf16.mxu0 0
        %811 = vmatpush1.bf16.msra.mxu0 0
        %812 = vmatprep.subr.bf16.mxu0 0
        %813 = vmatpush1.bf16.msra.mxu0 0
        %814 = vmatprep.subr.bf16.mxu0 0
        %815 = vmatpush1.bf16.msra.mxu0 0
        %816 = vmatprep.subr.bf16.mxu0 0
        %817 = vmatpush1.bf16.msra.mxu0 0
        %818 = vmatprep.subr.bf16.mxu0 0
        %819 = vmatpush1.bf16.msra.mxu0 0
        %820 = vmatprep.subr.bf16.mxu0 0
        %821 = vmatpush1.bf16.msra.mxu0 0
        %822 = vmatprep.subr.bf16.mxu0 0
        %823 = vmatpush1.bf16.msra.mxu0 0
        %824 = vmatprep.subr.bf16.mxu0 0
        %825 = vmatpush1.bf16.msra.mxu0 0
        %826 = vmatprep.subr.bf16.mxu0 0
        %827 = vmatpush1.bf16.msra.mxu0 0
        %828 = vmatprep.mubr.bf16.mxu0 0
        %829 = vmatmul.mubr.bf16.gmra.mrb[0].mxu0 %v791
        %v830 = vpop.f32.mrb[0].mxu0
        %v831 = vadd.f32 0.0, %v830
        %v832 = vpop.f32.mrb[0].mxu0
        %v833 = vpop.f32.mrb[0].mxu0
        %v834 = vpop.f32.mrb[0].mxu0
        %835 = vdwg.mxu0
        %v836 = vmul.f32 %v831, %v786
        %v837 = vpack.c.bf16 %v836, %v836
        %838 = vrot.lane.b32.xlu0 %v607, 104
        %v839 = vpop.permute.xlu0 %838
        %840 = vrot.lane.b32.xlu0 %v612, 104
        %v841 = vpop.permute.xlu0 %840
        %v843 = vsel %vm494, %v839, 0
        %v846 = vsel %vm494, %v841, 0
        %848 = vmatprep.subr.bf16.mxu0 0
        %849 = vmatpush1.bf16.xpose.msra.mxu0 %v846
        %850 = vmatprep.subr.bf16.mxu0 0
        %851 = vmatpush1.bf16.xpose.msra.mxu0 0
        %852 = vmatprep.subr.bf16.mxu0 0
        %853 = vmatpush1.bf16.xpose.msra.mxu0 0
        %854 = vmatprep.subr.bf16.mxu0 0
        %855 = vmatpush1.bf16.xpose.msra.mxu0 0
        %856 = vmatprep.subr.bf16.mxu0 0
        %857 = vmatpush1.bf16.xpose.msra.mxu0 0
        %858 = vmatprep.subr.bf16.mxu0 0
        %859 = vmatpush1.bf16.xpose.msra.mxu0 0
        %860 = vmatprep.subr.bf16.mxu0 0
        %861 = vmatpush1.bf16.xpose.msra.mxu0 0
        %862 = vmatprep.subr.bf16.mxu0 0
        %863 = vmatpush1.bf16.xpose.msra.mxu0 0
        %864 = vmatprep.subr.bf16.mxu0 0
        %865 = vmatpush1.bf16.xpose.msra.mxu0 0
        %866 = vmatprep.subr.bf16.mxu0 0
        %867 = vmatpush1.bf16.xpose.msra.mxu0 0
        %868 = vmatprep.subr.bf16.mxu0 0
        %869 = vmatpush1.bf16.xpose.msra.mxu0 0
        %870 = vmatprep.subr.bf16.mxu0 0
        %871 = vmatpush1.bf16.xpose.msra.mxu0 0
        %872 = vmatprep.subr.bf16.mxu0 0
        %873 = vmatpush1.bf16.xpose.msra.mxu0 0
        %874 = vmatprep.subr.bf16.mxu0 0
        %875 = vmatpush1.bf16.xpose.msra.mxu0 0
        %876 = vmatprep.subr.bf16.mxu0 0
        %877 = vmatpush1.bf16.xpose.msra.mxu0 0
        %878 = vmatprep.subr.bf16.mxu0 0
        %879 = vmatpush1.bf16.xpose.msra.mxu0 0
        %880 = vmatprep.mubr.bf16.mxu0 0
        %881 = vmatmul.mubr.bf16.gmra.mrb[0].mxu0 %v843
        %v882 = vpop.f32.mrb[0].mxu0
        %v883 = vadd.f32 0.0, %v882
        %v884 = vpop.f32.mrb[0].mxu0
        %v885 = vpop.f32.mrb[0].mxu0
        %v886 = vpop.f32.mrb[0].mxu0
        %887 = vdwg.mxu0
        %v888 = vsel %vm543, %v883, -1e+09
        %v889 = vsel %vm494, %v888, -inf
        %890 = vmax.xlane.f32.xlu0 %v889
        %v891 = vpop.xlane.xlu0 %890
        %v892 = vsub.f32 %v888, %v891
        %v893 = vmul.f32 %v892, 1.442695
        %v894 = vpow.pop %v893
        %v895 = vsel %vm494, %v894, 0.0
        %896 = vadd.xlane.f32.xlu0 %v895
        %v897 = vpop.xlane.xlu0 %896
        %v898 = vrcp.pop %v897
        %v899 = vpack.c.bf16 %v894, %v894
        %900 = vrot.lane.b32.xlu0 %v675, 104
        %v901 = vpop.permute.xlu0 %900
        %v903 = vsel %vm494, %v899, 0
        %v906 = vsel %vm559, %v901, 0
        %908 = vmatprep.subr.bf16.mxu0 0
        %909 = vmatpush1.bf16.msra.mxu0 %v906
        %910 = vmatprep.subr.bf16.mxu0 0
        %911 = vmatpush1.bf16.msra.mxu0 0
        %912 = vmatprep.subr.bf16.mxu0 0
        %913 = vmatpush1.bf16.msra.mxu0 0
        %914 = vmatprep.subr.bf16.mxu0 0
        %915 = vmatpush1.bf16.msra.mxu0 0
        %916 = vmatprep.subr.bf16.mxu0 0
        %917 = vmatpush1.bf16.msra.mxu0 0
        %918 = vmatprep.subr.bf16.mxu0 0
        %919 = vmatpush1.bf16.msra.mxu0 0
        %920 = vmatprep.subr.bf16.mxu0 0
        %921 = vmatpush1.bf16.msra.mxu0 0
        %922 = vmatprep.subr.bf16.mxu0 0
        %923 = vmatpush1.bf16.msra.mxu0 0
        %924 = vmatprep.subr.bf16.mxu0 0
        %925 = vmatpush1.bf16.msra.mxu0 0
        %926 = vmatprep.subr.bf16.mxu0 0
        %927 = vmatpush1.bf16.msra.mxu0 0
        %928 = vmatprep.subr.bf16.mxu0 0
        %929 = vmatpush1.bf16.msra.mxu0 0
        %930 = vmatprep.subr.bf16.mxu0 0
        %931 = vmatpush1.bf16.msra.mxu0 0
        %932 = vmatprep.subr.bf16.mxu0 0
        %933 = vmatpush1.bf16.msra.mxu0 0
        %934 = vmatprep.subr.bf16.mxu0 0
        %935 = vmatpush1.bf16.msra.mxu0 0
        %936 = vmatprep.subr.bf16.mxu0 0
        %937 = vmatpush1.bf16.msra.mxu0 0
        %938 = vmatprep.subr.bf16.mxu0 0
        %939 = vmatpush1.bf16.msra.mxu0 0
        %940 = vmatprep.mubr.bf16.mxu0 0
        %941 = vmatmul.mubr.bf16.gmra.mrb[0].mxu0 %v903
        %v942 = vpop.f32.mrb[0].mxu0
        %v943 = vadd.f32 0.0, %v942
        %v944 = vpop.f32.mrb[0].mxu0
        %v945 = vpop.f32.mrb[0].mxu0
        %v946 = vpop.f32.mrb[0].mxu0
        %947 = vdwg.mxu0
        %v948 = vmul.f32 %v943, %v898
        %v949 = vpack.c.bf16 %v948, %v948
        %951 = vrot.lane.b32.xlu0 %v725, 8
        %v952 = vpop.permute.xlu0 %951
        %954 = vrot.lane.b32.xlu0 %v837, 16
        %v955 = vpop.permute.xlu0 %954
        %957 = vrot.lane.b32.xlu0 %v949, 24
        %v958 = vpop.permute.xlu0 %957
        %v961 = vsel %vm494, %v604, %v952
        %vm962 = vcmask 130048
        %v964 = vsel %vm962, %v961, %v955
        %vm965 = vcmask 195584
        %v967 = vsel %vm965, %v964, %v958
        %v968 = vld [vmem:[%s435] sm:$0xff]
        %v969 = vld [vmem:[#allocation10] sm:$0xf]
        %v970 = vld [vmem:[#allocation10 + $0x4] sm:$0xf]
        %v971 = vld [vmem:[#allocation10 + $0x8] sm:$0xf]
        %v972 = vld [vmem:[#allocation10 + $0xc] sm:$0xf]
        %v977 = vunpack.c.l.b16 %v969
        %v978 = vunpack.c.l.b16 %v970
        %v979 = vunpack.c.l.b16 %v971
        %v980 = vunpack.c.l.b16 %v972
        %v981 = vpack.c.b16 %v978, %v977
        %v982 = vpack.c.b16 %v980, %v979
        %vm985 = vcmask 261120
        %v986 = vsel %vm985, %v967, 0
        %988 = vmatprep.subr.bf16.mxu0 0
        %989 = vmatpush1.bf16.msra.mxu0 %v981
        %990 = vmatprep.subr.bf16.mxu0 0
        %991 = vmatpush1.bf16.msra.mxu0 %v982
        %992 = vmatprep.subr.bf16.mxu0 0
        %993 = vmatpush1.bf16.msra.mxu0 0
        %994 = vmatprep.subr.bf16.mxu0 0
        %995 = vmatpush1.bf16.msra.mxu0 0
        %996 = vmatprep.subr.bf16.mxu0 0
        %997 = vmatpush1.bf16.msra.mxu0 0
        %998 = vmatprep.subr.bf16.mxu0 0
        %999 = vmatpush1.bf16.msra.mxu0 0
        %1000 = vmatprep.subr.bf16.mxu0 0
        %1001 = vmatpush1.bf16.msra.mxu0 0
        %1002 = vmatprep.subr.bf16.mxu0 0
        %1003 = vmatpush1.bf16.msra.mxu0 0
        %1004 = vmatprep.subr.bf16.mxu0 0
        %1005 = vmatpush1.bf16.msra.mxu0 0
        %1006 = vmatprep.subr.bf16.mxu0 0
        %1007 = vmatpush1.bf16.msra.mxu0 0
        %1008 = vmatprep.subr.bf16.mxu0 0
        %1009 = vmatpush1.bf16.msra.mxu0 0
        %1010 = vmatprep.subr.bf16.mxu0 0
        %1011 = vmatpush1.bf16.msra.mxu0 0
        %1012 = vmatprep.subr.bf16.mxu0 0
        %1013 = vmatpush1.bf16.msra.mxu0 0
        %1014 = vmatprep.subr.bf16.mxu0 0
        %1015 = vmatpush1.bf16.msra.mxu0 0
        %1016 = vmatprep.subr.bf16.mxu0 0
        %1017 = vmatpush1.bf16.msra.mxu0 0
        %1018 = vmatprep.subr.bf16.mxu0 0
        %1019 = vmatpush1.bf16.msra.mxu0 0
        %1020 = vmatprep.mubr.bf16.mxu0 0
        %1021 = vmatmul.mubr.bf16.gmra.mrb[0].mxu0 %v986
        %v1022 = vpop.f32.mrb[0].mxu0
        %v1023 = vadd.f32 0.0, %v1022
        %v1024 = vpop.f32.mrb[0].mxu0
        %v1025 = vpop.f32.mrb[0].mxu0
        %v1026 = vpop.f32.mrb[0].mxu0
        %1027 = vdwg.mxu0
        %v1028 = vadd.f32 %v968, %v1023
        %v1029 = vld [vmem:[#allocation11] sm:$0x1]
        %v1031 = vlaneseq
        %v1032 = vshrl.u32 %v1031, 7
        %v1033 = vsub.s32 0, %v1032
        %v1034 = vrot.slane %v1029, %v1033
        %v1036 = vadd.f32 %v1028, %v1034
        %1037 = vst.msk [vmem:[%s485] sm:$0xff] %vm985, %v1036
        %s1038 = sand.u32 %s231, 1
        %s1039 = scalar_lea.sflag [#allocation4], %s1038
        %s1040 = sand.u32 %s231, 1
        %s1041 = smul.addr %s1040, 8
        %s1042 = scalar_lea.vmem [#allocation14], %s1041
        // Predicated region
        $region77: #{encoder_forward.8} parent=47 // pred_check
          %p1043 = pneg %p241
        $region78: #{encoder_forward.8} parent=47 // pred_check_branch
          %1045 = sbr.rel (%p1043) target = $region80
        $region79: #{encoder_forward.8} parent=47 // pred_region
          %s1047 = ssub.s32 128, 128
          %1048 = vsyncadd %s1039, %s1047
          %s1049 = sadd.s32 %s36, %s35
          %s1050 = smul.addr %s1049, 128
          %s1051 = scalar_lea.hbm %s7, %s1050
          %s1053 = sshll.u32 %s1042, 4
          %s1054 = int_to_ptr.vmem [resolvable:$true] %s1053
          %1056 = dma.vmem_to_hbm [thread:$0]  %s1054, 128, %s1051, %s1039
        $region80: #{encoder_forward.8} parent=47 // pred_fallthru
          _
      $region48: #{encoder_forward.8} parent=5 // pred_fallthru
        _
      %p1057 = scmp.le.s32.totalorder 2, %s26
      // Predicated region
      $region81: #{encoder_forward.8} parent=5 // pred_check
        %p1058 = pneg %p1057
      $region82: #{encoder_forward.8} parent=5 // pred_check_branch
        %1060 = sbr.rel (%p1058) target = $region84
      $region83: #{encoder_forward.8} parent=5 // pred_region
        %s1061 = ssub.s32 %s26, 2
        // Predicated region
        $region85: #{encoder_forward.8} parent=83 // pred_check
          %p1062 = pneg %p247
        $region86: #{encoder_forward.8} parent=83 // pred_check_branch
          %1064 = sbr.rel (%p1062) target = $region88
        $region87: #{encoder_forward.8} parent=83 // pred_region
          %s1065 = sand.u32 %s232, 1
          %s1066 = scalar_lea.sflag [#allocation4], %s1065
          %s1067 = sand.u32 %s232, 1
          %s1068 = smul.addr %s1067, 8
          %s1069 = scalar_lea.vmem [#allocation14], %s1068
          %1070 = dma.done %s1066, 128
        $region88: #{encoder_forward.8} parent=83 // pred_fallthru
          _
      $region84: #{encoder_forward.8} parent=5 // pred_fallthru
        _
    $region6: #{encoder_forward.8} parent=1 // loop_footer
      %s30 = sadd.s32 1, %s26
    $region7: #{encoder_forward.8} parent=1 // loop_footer_branch
      %25 = sbr.rel target = $region3
    $region8: #{encoder_forward.8} parent=1 // loop_exit
      _
    %1071 = vsyncpa [#allocation3], 1
    %s1072 = scalar_lea.sflag [#allocation3], 1
    %1073 = vsyncpa %s1072, 1
    %1074 = vsyncpa [#allocation6], 1
    %s1075 = scalar_lea.sflag [#allocation6], 1
    %1076 = vsyncpa %s1075, 1
    %1077 = vsyncpa [#allocation9], 1
    %s1078 = scalar_lea.sflag [#allocation9], 1
    %1079 = vsyncpa %s1078, 1
    %1080 = vsyncpa [#allocation12], 1
    %1081 = vsyncpa [#allocation4], 1
    %s1082 = scalar_lea.sflag [#allocation4], 1
    %1083 = vsyncpa %s1082, 1

// kernel: encoder_forward.13
$region0: #{encoder_forward.13}
  #allocation0 [shape = 'u32[]', space=smem, size = 0x4, offset = 0x4, fixed_abs, tag = 'smem constant byte address 0x4 - core index']
  #allocation1 [shape = 'u32[144,128]{1,0:T(1,128)}', space=vmem, size = 0x12000, scoped, tag = 'internal scratch']
  %s0 = inlined_call_operand.hbm [shape: f32[16,32], index: 0, kind: input, shape index: {}]
  %s1 = inlined_call_operand.hbm [shape: f32[1,32], index: 1, kind: input, shape index: {}]
  %s2 = inlined_call_operand.hbm [shape: f32[1,32], index: 2, kind: input, shape index: {}]
  %s3 = inlined_call_operand.hbm [shape: f32[16,32], index: 3, kind: output, shape index: {}]
  %s4 = sld [smem:[#allocation0]]
  $region34: #{encoder_forward.13} parent=0
    _
  %s6 = ssub.s32 1, %s4
  %s7 = scalar_select 0, %s6, %s4
  $region1: #{encoder_forward.13} parent=0
    #allocation2 [shape = 'u8[8192]{0}', space=vmem, size = 0x2000, scoped, tag = 'input window, operand 0, single buffered']
    #allocation3 [shape = 's32[1]{0}', space=sflag, size = 0x4, scoped, tag = 'scoped memory for encoder_forward.13']
    #allocation4 [shape = 's32[1]{0}', space=sflag, size = 0x4, scoped, tag = 'scoped memory for encoder_forward.13']
    #allocation5 [shape = 'u8[512]{0}', space=vmem, size = 0x400, scoped, tag = 'input window, operand 1, single buffered']
    #allocation6 [shape = 's32[1]{0}', space=sflag, size = 0x4, scoped, tag = 'scoped memory for encoder_forward.13']
    #allocation7 [shape = 'u8[512]{0}', space=vmem, size = 0x400, scoped, tag = 'input window, operand 2, single buffered']
    #allocation8 [shape = 'u8[8192]{0}', space=vmem, size = 0x2000, scoped, tag = 'output window, operand 0, single buffered']
    %8 = vsyncpa [#allocation3], 0
    %9 = vsyncpa [#allocation6], 0
    %10 = vsyncpa [#allocation4], 0
    // Predicated region
    $region2: #{encoder_forward.13} parent=1 // pred_check
      _
    $region3: #{encoder_forward.13} parent=1 // pred_check_branch
      %12 = sbr.rel (0) target = $region5
    $region4: #{encoder_forward.13} parent=1 // pred_region
      %s14 = ssub.s32 256, 256
      %15 = vsyncadd [#allocation3], %s14
      %s16 = sshll.u32 [#allocation2], 4
      %s17 = int_to_ptr.vmem [resolvable:$true] %s16
      %22 = dma.hbm_to_vmem [thread:$0]  %s0, 256, %s17, [#allocation3], 128, 128, 8
    $region5: #{encoder_forward.13} parent=1 // pred_fallthru
      _
    // Predicated region
    $region6: #{encoder_forward.13} parent=1 // pred_check
      _
    $region7: #{encoder_forward.13} parent=1 // pred_check_branch
      %24 = sbr.rel (0) target = $region9
    $region8: #{encoder_forward.13} parent=1 // pred_region
      %s26 = ssub.s32 16, 16
      %27 = vsyncadd [#allocation6], %s26
      %s29 = sshll.u32 [#allocation5], 4
      %s30 = int_to_ptr.vmem [resolvable:$true] %s29
      %32 = dma.hbm_to_vmem [thread:$0]  %s1, 16, %s30, [#allocation6]
    $region9: #{encoder_forward.13} parent=1 // pred_fallthru
      _
    // Predicated region
    $region10: #{encoder_forward.13} parent=1 // pred_check
      _
    $region11: #{encoder_forward.13} parent=1 // pred_check_branch
      %34 = sbr.rel (0) target = $region13
    $region12: #{encoder_forward.13} parent=1 // pred_region
      %s36 = ssub.s32 16, 16
      %37 = vsyncadd [#allocation6], %s36
      %s39 = sshll.u32 [#allocation7], 4
      %s40 = int_to_ptr.vmem [resolvable:$true] %s39
      %42 = dma.hbm_to_vmem [thread:$0]  %s2, 16, %s40, [#allocation6]
    $region13: #{encoder_forward.13} parent=1 // pred_fallthru
      _
    // Predicated region
    $region14: #{encoder_forward.13} parent=1 // pred_check
      _
    $region15: #{encoder_forward.13} parent=1 // pred_check_branch
      %44 = sbr.rel (0) target = $region17
    $region16: #{encoder_forward.13} parent=1 // pred_region
      %45 = dma.done [#allocation3], 256
    $region17: #{encoder_forward.13} parent=1 // pred_fallthru
      _
    // Predicated region
    $region18: #{encoder_forward.13} parent=1 // pred_check
      _
    $region19: #{encoder_forward.13} parent=1 // pred_check_branch
      %47 = sbr.rel (0) target = $region21
    $region20: #{encoder_forward.13} parent=1 // pred_region
      %48 = dma.done [#allocation6], 16
    $region21: #{encoder_forward.13} parent=1 // pred_fallthru
      _
    // Predicated region
    $region22: #{encoder_forward.13} parent=1 // pred_check
      _
    $region23: #{encoder_forward.13} parent=1 // pred_check_branch
      %50 = sbr.rel (0) target = $region25
    $region24: #{encoder_forward.13} parent=1 // pred_region
      %51 = dma.done [#allocation6], 16
    $region25: #{encoder_forward.13} parent=1 // pred_fallthru
      _
    %v52 = vld [vmem:[#allocation2] sm:$0xff]
    %v53 = vld [vmem:[#allocation2 + $0x8] sm:$0xff]
    %v54 = vld [vmem:[#allocation5] sm:$0x1]
    %v55 = vld [vmem:[#allocation7] sm:$0x1]
    %vm56 = vcmask 261120
    %v57 = vsel %vm56, %v52, 0.0
    %58 = vadd.xlane.f32.xlu0 %v57
    %v59 = vpop.xlane.xlu0 %58
    %v60 = vsel %vm56, %v53, 0.0
    %61 = vadd.xlane.f32.xlu0 %v60
    %v62 = vpop.xlane.xlu0 %61
    %v63 = vrcp.pop 32.0
    %v64 = vmul.f32 %v59, %v63
    %v65 = vmul.f32 %v62, %v63
    %v66 = vsub.f32 %v52, %v64
    %v67 = vsub.f32 %v53, %v65
    %v68 = vmul.f32 %v66, %v66
    %v69 = vmul.f32 %v67, %v67
    %v70 = vsel %vm56, %v68, 0.0
    %71 = vadd.xlane.f32.xlu0 %v70
    %v72 = vpop.xlane.xlu0 %71
    %v73 = vsel %vm56, %v69, 0.0
    %74 = vadd.xlane.f32.xlu0 %v73
    %v75 = vpop.xlane.xlu0 %74
    %v76 = vrcp.pop 31.0
    %v77 = vmul.f32 %v72, %v76
    %v78 = vmul.f32 %v75, %v76
    %v79 = vrsqrt.pop %v77
    %v80 = vmul.f32 %v77, %v79
    %vm81 = vcmp.eq.f32.partialorder %v77, inf
    %v82 = vsel %vm81, %v77, %v80
    %vm83 = vcmp.eq.f32.partialorder %v77, 0.0
    %v84 = vand.u32 %v77, 2147483648
    %v85 = vsel %vm83, %v84, %v82
    %v86 = vrsqrt.pop %v78
    %v87 = vmul.f32 %v78, %v86
    %vm88 = vcmp.eq.f32.partialorder %v78, inf
    %v89 = vsel %vm88, %v78, %v87
    %vm90 = vcmp.eq.f32.partialorder %v78, 0.0
    %v91 = vand.u32 %v78, 2147483648
    %v92 = vsel %vm90, %v91, %v89
    %v93 = vadd.f32 %v85, 1e-06
    %v94 = vadd.f32 %v92, 1e-06
    %v95 = vrcp.pop %v93
    %v96 = vrcp.pop %v94
    %v98 = vlaneseq
    %v99 = vshrl.u32 %v98, 7
    %v100 = vsub.s32 0, %v99
    %v101 = vrot.slane %v54, %v100
    %v103 = vmul.f32 %v101, %v66
    %v104 = vmul.f32 %v101, %v67
    %v105 = vmul.f32 %v103, %v95
    %v106 = vmul.f32 %v104, %v96
    %v108 = vlaneseq
    %v109 = vshrl.u32 %v108, 7
    %v110 = vsub.s32 0, %v109
    %v111 = vrot.slane %v55, %v110
    %v113 = vadd.f32 %v105, %v111
    %v114 = vadd.f32 %v106, %v111
    %115 = vst.msk [vmem:[#allocation8] sm:$0xff] %vm56, %v113
    %116 = vst.msk [vmem:[#allocation8 + $0x8] sm:$0xff] %vm56, %v114
    // Predicated region
    $region26: #{encoder_forward.13} parent=1 // pred_check
      _
    $region27: #{encoder_forward.13} parent=1 // pred_check_branch
      %118 = sbr.rel (0) target = $region29
    $region28: #{encoder_forward.13} parent=1 // pred_region
      %s120 = ssub.s32 256, 256
      %121 = vsyncadd [#allocation4], %s120
      %s122 = sshll.u32 [#allocation8], 4
      %s123 = int_to_ptr.vmem [resolvable:$true] %s122
      %128 = dma.vmem_to_hbm [thread:$0]  %s123, 256, %s3, [#allocation4], 128, 128, 8
    $region29: #{encoder_forward.13} parent=1 // pred_fallthru
      _
    // Predicated region
    $region30: #{encoder_forward.13} parent=1 // pred_check
      _
    $region31: #{encoder_forward.13} parent=1 // pred_check_branch
      %130 = sbr.rel (0) target = $region33
    $region32: #{encoder_forward.13} parent=1 // pred_region
      %131 = dma.done [#allocation4], 256
    $region33: #{encoder_forward.13} parent=1 // pred_fallthru
      _
    %132 = vsyncpa [#allocation3], 1
    %133 = vsyncpa [#allocation6], 1
    %134 = vsyncpa [#allocation4], 1

</llo_original>
